<compile_context>
chip_gen: v7x
topology: tpu7x:2x2x1
jax: 0.10.0
libtpu: 0.0.40
codegen_flags: <defaults>
</compile_context>

<pallas_src>
import functools
import math

import jax
import jax.numpy as jnp
from jax import lax
from jax.experimental import pallas as pl
from jax.experimental.pallas import tpu as pltpu


def _heads_per_group(n_head, head_size, max_group_width=512):
    """Pick heads-per-group so the output block is lane-dense and legal.

    Legal group widths: block == full output (d == n_head) or width % 128 == 0.
    Prefer the smallest legal width in [128, max_group_width] (keeps several
    parallel grid steps for v7x while making every output store unmasked).
    """
    legal = [d for d in range(1, n_head + 1)
             if n_head % d == 0 and (d == n_head or (d * head_size) % 128 == 0)]
    preferred = [d for d in legal if 128 <= d * head_size <= max_group_width]
    if preferred:
        return preferred[0]
    wide = [d for d in legal if d * head_size >= 128]
    return wide[0] if wide else legal[-1]


def prepare_qkv_weights(w_key, w_query, w_value, *, n_embd,
                        compute_dtype=jnp.bfloat16, max_group_width=512):
    """Fuse per-head projection weights ONCE (hoisted out of the per-call path).

    w_* : (n_head, C, H) pre-transposed nn.Linear weights (bias=False).
    Returns (w_qkv, heads_per_group) with w_qkv of shape (G, C, 3*hg*H) laid out
    per group as [q_h0..q_h(hg-1) | k_... | v_...]. The softmax scale
    (n_embd**-0.5, as in the module) is folded into the query weights.
    """
    n_head, C, H = w_key.shape
    hg = _heads_per_group(n_head, H, max_group_width)
    G = n_head // hg
    wq_scaled = w_query * (float(n_embd) ** -0.5)

    def to_groups(w):  # (n_head, C, H) -> (G, C, hg*H), head order preserved
        return jnp.transpose(w.reshape(G, hg, C, H), (0, 2, 1, 3)).reshape(G, C, hg * H)

    w_qkv = jnp.concatenate(
        [to_groups(wq_scaled), to_groups(w_key), to_groups(w_value)], axis=-1)
    return w_qkv.astype(compute_dtype), hg


def mha_kernel(x_ref, w_ref, o_ref, *, head_size, heads_per_group):
    """One grid step = one (batch element, head group).

    x_ref : (T, C)        bf16 VMEM
    w_ref : (C, 3*hg*H)   bf16 VMEM, fused [q | k | v] weights for this group
    o_ref : (T, hg*H)     output VMEM (lane-dense when hg*H is a mult of 128)
    """
    T, _ = x_ref.shape
    H, hg = head_size, heads_per_group
    GW = hg * H

    # Fused QKV projection for the whole group: bf16 operands, f32 accumulation.
    qkv = jnp.dot(x_ref[...], w_ref[...],
                  preferred_element_type=jnp.float32)            # (T, 3*GW)
    q_all = qkv[:, :GW]            # group slabs are 128-lane-aligned slices
    k_all = qkv[:, GW:2 * GW]
    v_all = qkv[:, 2 * GW:]

    # Causal mask: computed once per grid step, reused by every head in the group.
    row = lax.broadcasted_iota(jnp.int32, (T, T), 0)
    col = lax.broadcasted_iota(jnp.int32, (T, T), 1)
    causal = col <= row

    outs = []
    for j in range(hg):  # static unroll over the heads of this group
        # TODO(synk): the per-head 64-lane slices are not 128-aligned (inherent
        # to head_size=64 < lane width); the relayout is small at T<=256.
        q = q_all[:, j * H:(j + 1) * H]
        k = k_all[:, j * H:(j + 1) * H]
        v = v_all[:, j * H:(j + 1) * H]

        # Scores: contract q, k on H (no materialized k.T). The n_embd**-0.5
        # scale was folded into the query weights at fusion time.
        s = lax.dot_general(q, k, dimension_numbers=(((1,), (1,)), ((), ())),
                            preferred_element_type=jnp.float32)  # (T, T)
        s = jnp.where(causal, s, -jnp.inf)

        # Numerically stable f32 softmax; reciprocal runs on the idle EUP slot.
        m = jnp.max(s, axis=-1, keepdims=True)
        p = jnp.exp(s - m)
        p = p * pl.reciprocal(jnp.sum(p, axis=-1, keepdims=True), approx=True)

        # TODO(synk): nn.Dropout(0.2) on the attention weights is identity in
        # eval mode; training mode needs a pltpu.prng_random_bits mask + 1/(1-p).

        outs.append(jnp.dot(p.astype(x_ref.dtype), v.astype(x_ref.dtype),
                            preferred_element_type=jnp.float32))  # (T, H)

    out = outs[0] if hg == 1 else jnp.concatenate(outs, axis=1)   # (T, hg*H)
    o_ref[...] = out.astype(o_ref.dtype)                          # one lane-dense store


def mha_forward(x, w_qkv, *, head_size, heads_per_group):
    """Fused multi-head forward: n_head independent `Head`s in one kernel.

    x     : (B, T, C)
    w_qkv : (G, C, 3*hg*H) from prepare_qkv_weights
    Returns (B, T, n_head*H); out[..., h*H:(h+1)*H] == Head_h(x) (eval mode).
    """
    B, T, C = x.shape
    G, Cw, W3 = w_qkv.shape
    hg = heads_per_group
    assert Cw == C and W3 == 3 * hg * head_size
    n_out = G * hg * head_size

    kernel = functools.partial(mha_kernel, head_size=head_size,
                               heads_per_group=hg)
    # TODO(synk): produce x in the compute dtype upstream to skip this per-call cast.
    x_c = x.astype(w_qkv.dtype)

    return pl.pallas_call(
        kernel,
        out_shape=jax.ShapeDtypeStruct((B, T, n_out), x.dtype),
        grid_spec=pltpu.PrefetchScalarGridSpec(
            num_scalar_prefetch=0,
            grid=(B, G),
            in_specs=[
                pl.BlockSpec((pl.Squeezed(), T, C), lambda b, g: (b, 0, 0)),
                pl.BlockSpec((pl.Squeezed(), C, 3 * hg * head_size),
                             lambda b, g: (g, 0, 0)),
            ],
            out_specs=pl.BlockSpec((pl.Squeezed(), T, hg * head_size),
                                   lambda b, g: (b, 0, g)),
        ),
        compiler_params=pltpu.CompilerParams(
            dimension_semantics=("parallel", "parallel")),
    )(x_c, w_qkv)


def head_forward(x, w_key, w_query, w_value, *, compute_dtype=jnp.bfloat16):
    """Original single-`Head` signature: x (B,T,C), w_* (C,H) -> (B,T,H)."""
    H = w_key.shape[1]
    w_qkv, hg = prepare_qkv_weights(w_key[None], w_query[None], w_value[None],
                                    n_embd=x.shape[-1],
                                    compute_dtype=compute_dtype)
    return mha_forward(x, w_qkv, head_size=H, heads_per_group=hg)


if __name__ == "__main__":
    # nanogpt shapes: n_embd = 384, 6 heads of head_size 64, T <= block_size=256.
    B, T, C, H, n_head = 2, 128, 384, 64, 6

    key = jax.random.PRNGKey(0)
    kx, kk, kq, kv = jax.random.split(key, 4)
    x = jax.random.normal(kx, (B, T, C), dtype=jnp.float32)

    # nn.Linear-style init U(-1/sqrt(C), 1/sqrt(C)), stored pre-transposed (C, H).
    bound = 1.0 / math.sqrt(C)
    w_key_  = jax.random.uniform(kk, (n_head, C, H), jnp.float32, -bound, bound)
    w_query = jax.random.uniform(kq, (n_head, C, H), jnp.float32, -bound, bound)
    w_value = jax.random.uniform(kv, (n_head, C, H), jnp.float32, -bound, bound)

    # Fuse + cast the projection weights ONCE (outside the per-call path).
    w_qkv, hg = prepare_qkv_weights(w_key_, w_query, w_value, n_embd=C)

    out = mha_forward(x, w_qkv, head_size=H, heads_per_group=hg)
    jax.block_until_ready(out)

    # Pure-JAX f32 reference: each 64-wide slice must equal one PyTorch Head(x).
    causal = jnp.tril(jnp.ones((T, T), dtype=bool))

    def head_ref(wk, wq, wv):
        k = x @ wk; q = x @ wq; v = x @ wv
        wei = jnp.einsum('btd,bsd->bts', q, k) * (C ** -0.5)   # module scales by C
        wei = jnp.where(causal, wei, -jnp.inf)
        wei = jax.nn.softmax(wei, axis=-1)
        return jnp.einsum('bts,bsd->btd', wei, v)

    expected = jnp.concatenate(
        [head_ref(w_key_[h], w_query[h], w_value[h]) for h in range(n_head)],
        axis=-1)

    assert out.shape == (B, T, n_head * H)
    # bf16 MXU operands + approx reciprocal vs. pure-f32 reference -> relaxed tol.
    assert jnp.allclose(out.astype(jnp.float32), expected, atol=5e-2, rtol=5e-2), \
        "fused multi-head kernel mismatch vs reference"

    # Single-`Head` path (exact original-module signature and output shape).
    out0 = head_forward(x, w_key_[0], w_query[0], w_value[0])
    jax.block_until_ready(out0)
    assert out0.shape == (B, T, H)
    assert jnp.allclose(out0.astype(jnp.float32), expected[..., :H],
                        atol=5e-2, rtol=5e-2), \
        "single-head kernel mismatch vs reference"

    print("KERNEL_OK")
</pallas_src>

<mosaic_0001>
module attributes {stable_mosaic.version = 11 : i64} {
  func.func @mha_kernel(%arg0: i32, %arg1: i32, %arg2: memref<1x128x384xbf16, #tpu.memory_space<vmem>>, %arg3: memref<1x384x384xbf16, #tpu.memory_space<vmem>>, %arg4: memref<1x128x128xf32, #tpu.memory_space<vmem>>) attributes {dimension_semantics = [#tpu.dimension_semantics<parallel>, #tpu.dimension_semantics<parallel>], iteration_bounds = array<i64: 2, 3>, scalar_prefetch = 0 : i64, scratch_operands = 0 : i64, tpu.core_type = #tpu.core_type<tc>, window_params = [{transform_indices = @transform_0, window_bounds = array<i64: 1, 128, 384>}, {transform_indices = @transform_1, window_bounds = array<i64: 1, 384, 384>}, {transform_indices = @transform_2, window_bounds = array<i64: 1, 128, 128>}]} {
    %c0 = arith.constant 0 : index
    %c0_0 = arith.constant 0 : index
    %c0_1 = arith.constant 0 : index
    %0 = vector.load %arg2[%c0, %c0_0, %c0_1] : memref<1x128x384xbf16, #tpu.memory_space<vmem>>, vector<1x128x384xbf16>
    %1 = vector.shape_cast %0 : vector<1x128x384xbf16> to vector<128x384xbf16>
    %c0_2 = arith.constant 0 : index
    %c0_3 = arith.constant 0 : index
    %c0_4 = arith.constant 0 : index
    %2 = vector.load %arg3[%c0_2, %c0_3, %c0_4] : memref<1x384x384xbf16, #tpu.memory_space<vmem>>, vector<1x384x384xbf16>
    %3 = vector.shape_cast %2 : vector<1x384x384xbf16> to vector<384x384xbf16>
    %cst = arith.constant dense<0.000000e+00> : vector<128x384xf32>
    %4 = tpu.matmul %1, %3, %cst {dimension_numbers = #tpu.dot_dimension_numbers<[1], [0], [0], [1], [0, 0, 1, 1], [], []>} : vector<128x384xbf16>, vector<384x384xbf16>, vector<128x384xf32> -> vector<128x384xf32>
    %5 = vector.extract_strided_slice %4 {offsets = [0, 0], sizes = [128, 128], strides = [1, 1]} : vector<128x384xf32> to vector<128x128xf32>
    %6 = vector.extract_strided_slice %4 {offsets = [0, 128], sizes = [128, 128], strides = [1, 1]} : vector<128x384xf32> to vector<128x128xf32>
    %7 = vector.extract_strided_slice %4 {offsets = [0, 256], sizes = [128, 128], strides = [1, 1]} : vector<128x384xf32> to vector<128x128xf32>
    %8 = tpu.iota {dimensions = array<i32: 0>} : vector<128x128xi32>
    %9 = tpu.iota {dimensions = array<i32: 1>} : vector<128x128xi32>
    %10 = arith.cmpi sle, %9, %8 : vector<128x128xi32>
    %11 = vector.extract_strided_slice %5 {offsets = [0, 0], sizes = [128, 64], strides = [1, 1]} : vector<128x128xf32> to vector<128x64xf32>
    %12 = vector.extract_strided_slice %6 {offsets = [0, 0], sizes = [128, 64], strides = [1, 1]} : vector<128x128xf32> to vector<128x64xf32>
    %13 = vector.extract_strided_slice %7 {offsets = [0, 0], sizes = [128, 64], strides = [1, 1]} : vector<128x128xf32> to vector<128x64xf32>
    %cst_5 = arith.constant dense<0.000000e+00> : vector<128x128xf32>
    %14 = tpu.matmul %11, %12, %cst_5 {dimension_numbers = #tpu.dot_dimension_numbers<[1], [1], [0], [0], [0, 0, 1, 0], [], []>} : vector<128x64xf32>, vector<128x64xf32>, vector<128x128xf32> -> vector<128x128xf32>
    %cst_6 = arith.constant 0xFF800000 : f32
    %15 = vector.broadcast %cst_6 : f32 to vector<128x128xf32>
    %16 = arith.select %10, %14, %15 : vector<128x128xi1>, vector<128x128xf32>
    %cst_7 = arith.constant dense<0xFF800000> : vector<128xf32>
    %17 = vector.multi_reduction <maximumf>, %16, %cst_7 [1] : vector<128x128xf32> to vector<128xf32>
    %18 = vector.shape_cast %17 : vector<128xf32> to vector<128x1xf32>
    %19 = vector.broadcast %18 : vector<128x1xf32> to vector<128x128xf32>
    %20 = arith.subf %16, %19 : vector<128x128xf32>
    %21 = math.exp %20 : vector<128x128xf32>
    %cst_8 = arith.constant dense<0.000000e+00> : vector<128xf32>
    %22 = vector.multi_reduction <add>, %21, %cst_8 [1] : vector<128x128xf32> to vector<128xf32>
    %23 = vector.shape_cast %22 : vector<128xf32> to vector<128x1xf32>
    %24 = tpu.reciprocal %23 {approx = true} : vector<128x1xf32> -> vector<128x1xf32>
    %25 = vector.broadcast %24 : vector<128x1xf32> to vector<128x128xf32>
    %26 = arith.mulf %21, %25 : vector<128x128xf32>
    %27 = arith.truncf %26 : vector<128x128xf32> to vector<128x128xbf16>
    %28 = arith.truncf %13 : vector<128x64xf32> to vector<128x64xbf16>
    %cst_9 = arith.constant dense<0.000000e+00> : vector<128x64xf32>
    %29 = tpu.matmul %27, %28, %cst_9 {dimension_numbers = #tpu.dot_dimension_numbers<[1], [0], [0], [1], [0, 0, 1, 1], [], []>} : vector<128x128xbf16>, vector<128x64xbf16>, vector<128x64xf32> -> vector<128x64xf32>
    %30 = vector.extract_strided_slice %5 {offsets = [0, 64], sizes = [128, 64], strides = [1, 1]} : vector<128x128xf32> to vector<128x64xf32>
    %31 = vector.extract_strided_slice %6 {offsets = [0, 64], sizes = [128, 64], strides = [1, 1]} : vector<128x128xf32> to vector<128x64xf32>
    %32 = vector.extract_strided_slice %7 {offsets = [0, 64], sizes = [128, 64], strides = [1, 1]} : vector<128x128xf32> to vector<128x64xf32>
    %cst_10 = arith.constant dense<0.000000e+00> : vector<128x128xf32>
    %33 = tpu.matmul %30, %31, %cst_10 {dimension_numbers = #tpu.dot_dimension_numbers<[1], [1], [0], [0], [0, 0, 1, 0], [], []>} : vector<128x64xf32>, vector<128x64xf32>, vector<128x128xf32> -> vector<128x128xf32>
    %cst_11 = arith.constant 0xFF800000 : f32
    %34 = vector.broadcast %cst_11 : f32 to vector<128x128xf32>
    %35 = arith.select %10, %33, %34 : vector<128x128xi1>, vector<128x128xf32>
    %cst_12 = arith.constant dense<0xFF800000> : vector<128xf32>
    %36 = vector.multi_reduction <maximumf>, %35, %cst_12 [1] : vector<128x128xf32> to vector<128xf32>
    %37 = vector.shape_cast %36 : vector<128xf32> to vector<128x1xf32>
    %38 = vector.broadcast %37 : vector<128x1xf32> to vector<128x128xf32>
    %39 = arith.subf %35, %38 : vector<128x128xf32>
    %40 = math.exp %39 : vector<128x128xf32>
    %cst_13 = arith.constant dense<0.000000e+00> : vector<128xf32>
    %41 = vector.multi_reduction <add>, %40, %cst_13 [1] : vector<128x128xf32> to vector<128xf32>
    %42 = vector.shape_cast %41 : vector<128xf32> to vector<128x1xf32>
    %43 = tpu.reciprocal %42 {approx = true} : vector<128x1xf32> -> vector<128x1xf32>
    %44 = vector.broadcast %43 : vector<128x1xf32> to vector<128x128xf32>
    %45 = arith.mulf %40, %44 : vector<128x128xf32>
    %46 = arith.truncf %45 : vector<128x128xf32> to vector<128x128xbf16>
    %47 = arith.truncf %32 : vector<128x64xf32> to vector<128x64xbf16>
    %cst_14 = arith.constant dense<0.000000e+00> : vector<128x64xf32>
    %48 = tpu.matmul %46, %47, %cst_14 {dimension_numbers = #tpu.dot_dimension_numbers<[1], [0], [0], [1], [0, 0, 1, 1], [], []>} : vector<128x128xbf16>, vector<128x64xbf16>, vector<128x64xf32> -> vector<128x64xf32>
    %49 = tpu.concatenate %29, %48 in 1 : vector<128x64xf32>, vector<128x64xf32> -> vector<128x128xf32>
    %c0_15 = arith.constant 0 : index
    %c0_16 = arith.constant 0 : index
    %c0_17 = arith.constant 0 : index
    %50 = vector.load %arg4[%c0_15, %c0_16, %c0_17] : memref<1x128x128xf32, #tpu.memory_space<vmem>>, vector<1x128x128xf32>
    %51 = vector.shape_cast %50 : vector<1x128x128xf32> to vector<128x128xf32>
    %52 = vector.shape_cast %49 : vector<128x128xf32> to vector<1x128x128xf32>
    tpu.vector_store %arg4[%c0_15, %c0_16, %c0_17], %52 {strides = array<i32>} : memref<1x128x128xf32, #tpu.memory_space<vmem>>, vector<1x128x128xf32>,
    return
  }
  func.func @transform_0(%arg0: i32, %arg1: i32) -> (i32, i32, i32) {
    %c0_i32 = arith.constant 0 : i32
    %c0_i32_0 = arith.constant 0 : i32
    %c0_i32_1 = arith.constant 0 : i32
    return %arg0, %c0_i32, %c0_i32_0 : i32, i32, i32
  }
  func.func @transform_1(%arg0: i32, %arg1: i32) -> (i32, i32, i32) {
    %c0_i32 = arith.constant 0 : i32
    %c0_i32_0 = arith.constant 0 : i32
    %c0_i32_1 = arith.constant 0 : i32
    return %arg1, %c0_i32, %c0_i32_0 : i32, i32, i32
  }
  func.func @transform_2(%arg0: i32, %arg1: i32) -> (i32, i32, i32) {
    %c0_i32 = arith.constant 0 : i32
    %c0_i32_0 = arith.constant 0 : i32
    return %arg0, %c0_i32, %arg1 : i32, i32, i32
  }
}

</mosaic_0001>

<llo_original>
// kernel: tpu_custom_call.1
$region0: #{tpu_custom_call.1}
  #allocation0 [shape = 'u32[]', space=smem, size = 0x4, offset = 0x4, fixed_abs, tag = 'smem constant byte address 0x4 - core index']
  #allocation1 [shape = 'u32[144,128]{1,0:T(1,128)}', space=vmem, size = 0x12000, scoped, tag = 'internal scratch']
  %s0 = inlined_call_operand.hbm [shape: bf16[2,128,384], index: 0, kind: input, shape index: {}]
  %s1 = inlined_call_operand.hbm [shape: bf16[3,384,384], index: 1, kind: input, shape index: {}]
  %s2 = inlined_call_operand.hbm [shape: f32[2,128,384], index: 2, kind: output, shape index: {}]
  %s3 = sld [smem:[#allocation0]]
  $region49: #{tpu_custom_call.1} parent=0
    _
  %s5 = ssub.s32 1, %s3
  %s6 = scalar_select 0, %s5, %s3
  $region1: #{tpu_custom_call.1} parent=0
    #allocation2 [shape = 'u8[196608]{0}', space=vmem, size = 0x30000, scoped, tag = 'input window, operand 0']
    #allocation3 [shape = 's32[2]{0}', space=sflag, size = 0x8, scoped, tag = 'scoped memory for tpu_custom_call.1']
    #allocation4 [shape = 's32[2]{0}', space=sflag, size = 0x8, scoped, tag = 'scoped memory for tpu_custom_call.1']
    #allocation5 [shape = 'u8[589824]{0}', space=vmem, size = 0x90000, scoped, tag = 'input window, operand 1']
    #allocation6 [shape = 's32[2]{0}', space=sflag, size = 0x8, scoped, tag = 'scoped memory for tpu_custom_call.1']
    #allocation7 [shape = 'u8[131072]{0}', space=vmem, size = 0x20000, scoped, tag = 'output window, operand 0']
    %7 = vsyncpa [#allocation3], 0
    %s8 = scalar_lea.sflag [#allocation3], 1
    %9 = vsyncpa %s8, 0
    %10 = vsyncpa [#allocation6], 0
    %s11 = scalar_lea.sflag [#allocation6], 1
    %12 = vsyncpa %s11, 0
    %13 = vsyncpa [#allocation4], 0
    %s14 = scalar_lea.sflag [#allocation4], 1
    %15 = vsyncpa %s14, 0
    loop: start=0, step=1, limit=8
    $region2: #{tpu_custom_call.1} parent=1 // loop_pre_header
      _
    $region3: #{tpu_custom_call.1} parent=1 // loop_header
      %s17 = sphi 0, %s21
      %p18 = scmp.ge.s32.totalorder %s17, 8
      %s24 = sphi 0, %s36
      %s25 = sphi 0, %s32
      %s26 = sphi 0, %s24
      %s27 = sphi 0, %s25
      %s28 = sphi 0, %s26
      %s29 = sphi 0, %s27
      %s39 = sphi 0, %s41
      %s42 = sphi 0, %s39
      %s43 = sphi 0, %s42
      %s59 = sphi 0, %s43
      %s65 = sphi 0, %s67
      %s68 = sphi 0, %s65
      %s69 = sphi 0, %s68
      %s85 = sphi 0, %s69
      %s93 = sphi 0, %s95
      %s96 = sphi 0, %s93
      %s97 = sphi 0, %s96
      %s113 = sphi 0, %s97
    $region4: #{tpu_custom_call.1} parent=1 // loop_header_branch
      %20 = sbr.rel (%p18) target = $region8
    $region5: #{tpu_custom_call.1} parent=1 // loop_body
      %s22 = ssub.s32 %s17, 1
      %s23 = ssub.s32 %s17, 2
      %s30 = sadd.s32 1, %s25
      %p31 = scmp.ge.s32.totalorder %s30, 3
      %s32 = scalar_select %p31, 0, %s30
      %s33 = sadd.s32 1, %s24
      %s34 = scalar_select %p31, %s33, %s24
      %p35 = scmp.ge.s32.totalorder %s34, 2
      %s36 = scalar_select %p35, 0, %s34
      %s37 = ssub.s32 %s24, %s36
      %p38 = scmp.eq.s32.totalorder %s37, 0
      %s40 = sadd.s32 %s39, 1
      %s41 = scalar_select %p38, %s39, %s40
      %p44 = pneg %p38
      %p45 = scmp.eq.s32.totalorder %s17, 5
      %p46 = por %p44, %p45
      %p47 = scmp.ne.s32.totalorder %s39, %s42
      %p48 = scmp.eq.s32.totalorder %s17, 0
      %p49 = por %p47, %p48
      %p50 = scmp.ne.s32.totalorder %s39, %s42
      %p51 = scmp.eq.s32.totalorder %s22, 5
      %p52 = por %p50, %p51
      %p53 = scmp.ne.s32.totalorder %s42, %s43
      %p54 = scmp.eq.s32.totalorder %s22, 0
      %p55 = por %p53, %p54
      %p56 = scmp.ne.s32.totalorder %s42, %s43
      %p57 = scmp.eq.s32.totalorder %s23, 5
      %p58 = por %p56, %p57
      %p60 = scmp.ne.s32.totalorder %s43, %s59
      %p61 = scmp.eq.s32.totalorder %s23, 0
      %p62 = por %p60, %p61
      %s63 = ssub.s32 %s25, %s32
      %p64 = scmp.eq.s32.totalorder %s63, 0
      %s66 = sadd.s32 %s65, 1
      %s67 = scalar_select %p64, %s65, %s66
      %p70 = pneg %p64
      %p71 = scmp.eq.s32.totalorder %s17, 5
      %p72 = por %p70, %p71
      %p73 = scmp.ne.s32.totalorder %s65, %s68
      %p74 = scmp.eq.s32.totalorder %s17, 0
      %p75 = por %p73, %p74
      %p76 = scmp.ne.s32.totalorder %s65, %s68
      %p77 = scmp.eq.s32.totalorder %s22, 5
      %p78 = por %p76, %p77
      %p79 = scmp.ne.s32.totalorder %s68, %s69
      %p80 = scmp.eq.s32.totalorder %s22, 0
      %p81 = por %p79, %p80
      %p82 = scmp.ne.s32.totalorder %s68, %s69
      %p83 = scmp.eq.s32.totalorder %s23, 5
      %p84 = por %p82, %p83
      %p86 = scmp.ne.s32.totalorder %s69, %s85
      %p87 = scmp.eq.s32.totalorder %s23, 0
      %p88 = por %p86, %p87
      %s89 = ssub.s32 %s24, %s36
      %s90 = ssub.s32 %s25, %s32
      %s91 = sor.u32 %s89, %s90
      %p92 = scmp.eq.s32.totalorder %s91, 0
      %s94 = sadd.s32 %s93, 1
      %s95 = scalar_select %p92, %s93, %s94
      %p98 = pneg %p92
      %p99 = scmp.eq.s32.totalorder %s17, 5
      %p100 = por %p98, %p99
      %p101 = scmp.ne.s32.totalorder %s93, %s96
      %p102 = scmp.eq.s32.totalorder %s17, 0
      %p103 = por %p101, %p102
      %p104 = scmp.ne.s32.totalorder %s93, %s96
      %p105 = scmp.eq.s32.totalorder %s22, 5
      %p106 = por %p104, %p105
      %p107 = scmp.ne.s32.totalorder %s96, %s97
      %p108 = scmp.eq.s32.totalorder %s22, 0
      %p109 = por %p107, %p108
      %p110 = scmp.ne.s32.totalorder %s96, %s97
      %p111 = scmp.eq.s32.totalorder %s23, 5
      %p112 = por %p110, %p111
      %p114 = scmp.ne.s32.totalorder %s97, %s113
      %p115 = scmp.eq.s32.totalorder %s23, 0
      %p116 = por %p114, %p115
      %p117 = scmp.le.s32.totalorder 1, %s17
      %p118 = scmp.lt.s32.totalorder %s17, 7
      %p119 = pnand %p117, %p118
      %p120 = pneg %p119
      // Predicated region
      $region9: #{tpu_custom_call.1} parent=5 // pred_check
        _
      $region10: #{tpu_custom_call.1} parent=5 // pred_check_branch
        %122 = sbr.rel (%p119) target = $region12
      $region11: #{tpu_custom_call.1} parent=5 // pred_region
        %s123 = ssub.s32 %s17, 1
      $region12: #{tpu_custom_call.1} parent=5 // pred_fallthru
        _
      %p124 = scmp.lt.s32.totalorder %s17, 6
      // Predicated region
      $region13: #{tpu_custom_call.1} parent=5 // pred_check
        %p125 = pneg %p124
      $region14: #{tpu_custom_call.1} parent=5 // pred_check_branch
        %127 = sbr.rel (%p125) target = $region16
      $region15: #{tpu_custom_call.1} parent=5 // pred_region
        // Predicated region
        $region17: #{tpu_custom_call.1} parent=15 // pred_check
          %p128 = pneg %p49
        $region18: #{tpu_custom_call.1} parent=15 // pred_check_branch
          %130 = sbr.rel (%p128) target = $region20
        $region19: #{tpu_custom_call.1} parent=15 // pred_region
          %s131 = sand.u32 %s39, 1
          %s132 = scalar_lea.sflag [#allocation3], %s131
          %s133 = sand.u32 %s39, 1
          %s134 = smul.addr %s133, 192
          %s135 = scalar_lea.vmem [#allocation2], %s134
          %s137 = ssub.s32 3072, 3072
          %138 = vsyncadd %s132, %s137
          %s139 = smul.addr %s24, 48
          %s140 = smul.addr %s139, 64
          %s141 = scalar_lea.hbm %s0, %s140
          %s142 = sshll.u32 %s135, 4
          %s143 = int_to_ptr.vmem [resolvable:$true] %s142
          %148 = dma.hbm_to_vmem [thread:$0]  %s141, 3072, %s143, %s132, 192, 192, 12
        $region20: #{tpu_custom_call.1} parent=15 // pred_fallthru
          _
        // Predicated region
        $region21: #{tpu_custom_call.1} parent=15 // pred_check
          %p149 = pneg %p75
        $region22: #{tpu_custom_call.1} parent=15 // pred_check_branch
          %151 = sbr.rel (%p149) target = $region24
        $region23: #{tpu_custom_call.1} parent=15 // pred_region
          %s152 = sand.u32 %s65, 1
          %s153 = scalar_lea.sflag [#allocation6], %s152
          %s154 = sand.u32 %s65, 1
          %s155 = smul.addr %s154, 576
          %s156 = scalar_lea.vmem [#allocation5], %s155
          %s158 = ssub.s32 9216, 9216
          %159 = vsyncadd %s153, %s158
          %s160 = smul.addr %s25, 144
          %s161 = smul.addr %s160, 64
          %s162 = scalar_lea.hbm %s1, %s161
          %s163 = sshll.u32 %s156, 4
          %s164 = int_to_ptr.vmem [resolvable:$true] %s163
          %169 = dma.hbm_to_vmem [thread:$0]  %s162, 9216, %s164, %s153, 192, 192, 12
        $region24: #{tpu_custom_call.1} parent=15 // pred_fallthru
          _
      $region16: #{tpu_custom_call.1} parent=5 // pred_fallthru
        _
      %p170 = scmp.le.s32.totalorder 1, %s17
      %p171 = scmp.lt.s32.totalorder %s17, 7
      %p172 = pnand %p170, %p171
      %p173 = pneg %p172
      // Predicated region
      $region25: #{tpu_custom_call.1} parent=5 // pred_check
        _
      $region26: #{tpu_custom_call.1} parent=5 // pred_check_branch
        %175 = sbr.rel (%p172) target = $region28
      $region27: #{tpu_custom_call.1} parent=5 // pred_region
        %s176 = ssub.s32 %s17, 1
        %s177 = sand.u32 %s42, 1
        %s178 = scalar_lea.sflag [#allocation3], %s177
        %s179 = sand.u32 %s42, 1
        %s180 = smul.addr %s179, 192
        %s181 = scalar_lea.vmem [#allocation2], %s180
        // Predicated region
        $region29: #{tpu_custom_call.1} parent=27 // pred_check
          %p182 = pneg %p55
        $region30: #{tpu_custom_call.1} parent=27 // pred_check_branch
          %184 = sbr.rel (%p182) target = $region32
        $region31: #{tpu_custom_call.1} parent=27 // pred_region
          %185 = dma.done %s178, 3072
        $region32: #{tpu_custom_call.1} parent=27 // pred_fallthru
          _
        %s186 = sand.u32 %s68, 1
        %s187 = scalar_lea.sflag [#allocation6], %s186
        %s188 = sand.u32 %s68, 1
        %s189 = smul.addr %s188, 576
        %s190 = scalar_lea.vmem [#allocation5], %s189
        // Predicated region
        $region33: #{tpu_custom_call.1} parent=27 // pred_check
          %p191 = pneg %p81
        $region34: #{tpu_custom_call.1} parent=27 // pred_check_branch
          %193 = sbr.rel (%p191) target = $region36
        $region35: #{tpu_custom_call.1} parent=27 // pred_region
          %194 = dma.done %s187, 9216
        $region36: #{tpu_custom_call.1} parent=27 // pred_fallthru
          _
        %s195 = sand.u32 %s42, 1
        %s196 = scalar_lea.sflag [#allocation3], %s195
        %s197 = sand.u32 %s42, 1
        %s198 = smul.addr %s197, 192
        %s199 = scalar_lea.vmem [#allocation2], %s198
        %p200 = pneg %p55
        %p201 = pneg %p52
        %s202 = sand.u32 %s68, 1
        %s203 = scalar_lea.sflag [#allocation6], %s202
        %s204 = sand.u32 %s68, 1
        %s205 = smul.addr %s204, 576
        %s206 = scalar_lea.vmem [#allocation5], %s205
        %p207 = pneg %p81
        %p208 = pneg %p78
        %p209 = pneg %p109
        %p210 = pneg %p106
        %s211 = sand.u32 %s96, 1
        %s212 = scalar_lea.sflag [#allocation4], %s211
        %s213 = sand.u32 %s96, 1
        %s214 = smul.addr %s213, 128
        %s215 = scalar_lea.vmem [#allocation7], %s214
        %v217 = vld [vmem:[%s181] sm:$0xff]
        %v218 = vld [vmem:[%s181 + $0x8] sm:$0xf]
        %v219 = vld [vmem:[%s181 + $0xc] sm:$0xff]
        %v220 = vld [vmem:[%s181 + $0x14] sm:$0xf]
        %v221 = vld [vmem:[%s181 + $0x18] sm:$0xff]
        %v222 = vld [vmem:[%s181 + $0x20] sm:$0xf]
        %v223 = vld [vmem:[%s181 + $0x24] sm:$0xff]
        %v224 = vld [vmem:[%s181 + $0x2c] sm:$0xf]
        %v225 = vld [vmem:[%s181 + $0x30] sm:$0xff]
        %v226 = vld [vmem:[%s181 + $0x38] sm:$0xf]
        %v227 = vld [vmem:[%s181 + $0x3c] sm:$0xff]
        %v228 = vld [vmem:[%s181 + $0x44] sm:$0xf]
        %v229 = vld [vmem:[%s181 + $0x48] sm:$0xff]
        %v230 = vld [vmem:[%s181 + $0x50] sm:$0xf]
        %v231 = vld [vmem:[%s181 + $0x54] sm:$0xff]
        %v232 = vld [vmem:[%s181 + $0x5c] sm:$0xf]
        %v233 = vld [vmem:[%s181 + $0x60] sm:$0xff]
        %v234 = vld [vmem:[%s181 + $0x68] sm:$0xf]
        %v235 = vld [vmem:[%s181 + $0x6c] sm:$0xff]
        %v236 = vld [vmem:[%s181 + $0x74] sm:$0xf]
        %v237 = vld [vmem:[%s181 + $0x78] sm:$0xff]
        %v238 = vld [vmem:[%s181 + $0x80] sm:$0xf]
        %v239 = vld [vmem:[%s181 + $0x84] sm:$0xff]
        %v240 = vld [vmem:[%s181 + $0x8c] sm:$0xf]
        %v241 = vld [vmem:[%s181 + $0x90] sm:$0xff]
        %v242 = vld [vmem:[%s181 + $0x98] sm:$0xf]
        %v243 = vld [vmem:[%s181 + $0x9c] sm:$0xff]
        %v244 = vld [vmem:[%s181 + $0xa4] sm:$0xf]
        %v245 = vld [vmem:[%s181 + $0xa8] sm:$0xff]
        %v246 = vld [vmem:[%s181 + $0xb0] sm:$0xf]
        %v247 = vld [vmem:[%s181 + $0xb4] sm:$0xff]
        %v248 = vld [vmem:[%s181 + $0xbc] sm:$0xf]
        %v249 = vld [vmem:[%s190] sm:$0xff]
        %v250 = vld [vmem:[%s190 + $0x8] sm:$0xf]
        %v251 = vld [vmem:[%s190 + $0xc] sm:$0xff]
        %v252 = vld [vmem:[%s190 + $0x14] sm:$0xf]
        %v253 = vld [vmem:[%s190 + $0x18] sm:$0xff]
        %v254 = vld [vmem:[%s190 + $0x20] sm:$0xf]
        %v255 = vld [vmem:[%s190 + $0x24] sm:$0xff]
        %v256 = vld [vmem:[%s190 + $0x2c] sm:$0xf]
        %v257 = vld [vmem:[%s190 + $0x30] sm:$0xff]
        %v258 = vld [vmem:[%s190 + $0x38] sm:$0xf]
        %v259 = vld [vmem:[%s190 + $0x3c] sm:$0xff]
        %v260 = vld [vmem:[%s190 + $0x44] sm:$0xf]
        %v261 = vld [vmem:[%s190 + $0x48] sm:$0xff]
        %v262 = vld [vmem:[%s190 + $0x50] sm:$0xf]
        %v263 = vld [vmem:[%s190 + $0x54] sm:$0xff]
        %v264 = vld [vmem:[%s190 + $0x5c] sm:$0xf]
        %v265 = vld [vmem:[%s190 + $0x60] sm:$0xff]
        %v266 = vld [vmem:[%s190 + $0x68] sm:$0xf]
        %v267 = vld [vmem:[%s190 + $0x6c] sm:$0xff]
        %v268 = vld [vmem:[%s190 + $0x74] sm:$0xf]
        %v269 = vld [vmem:[%s190 + $0x78] sm:$0xff]
        %v270 = vld [vmem:[%s190 + $0x80] sm:$0xf]
        %v271 = vld [vmem:[%s190 + $0x84] sm:$0xff]
        %v272 = vld [vmem:[%s190 + $0x8c] sm:$0xf]
        %v273 = vld [vmem:[%s190 + $0x90] sm:$0xff]
        %v274 = vld [vmem:[%s190 + $0x98] sm:$0xf]
        %v275 = vld [vmem:[%s190 + $0x9c] sm:$0xff]
        %v276 = vld [vmem:[%s190 + $0xa4] sm:$0xf]
        %v277 = vld [vmem:[%s190 + $0xa8] sm:$0xff]
        %v278 = vld [vmem:[%s190 + $0xb0] sm:$0xf]
        %v279 = vld [vmem:[%s190 + $0xb4] sm:$0xff]
        %v280 = vld [vmem:[%s190 + $0xbc] sm:$0xf]
        %v281 = vld [vmem:[%s190 + $0xc0] sm:$0xff]
        %v282 = vld [vmem:[%s190 + $0xc8] sm:$0xf]
        %v283 = vld [vmem:[%s190 + $0xcc] sm:$0xff]
        %v284 = vld [vmem:[%s190 + $0xd4] sm:$0xf]
        %v285 = vld [vmem:[%s190 + $0xd8] sm:$0xff]
        %v286 = vld [vmem:[%s190 + $0xe0] sm:$0xf]
        %v287 = vld [vmem:[%s190 + $0xe4] sm:$0xff]
        %v288 = vld [vmem:[%s190 + $0xec] sm:$0xf]
        %v289 = vld [vmem:[%s190 + $0xf0] sm:$0xff]
        %v290 = vld [vmem:[%s190 + $0xf8] sm:$0xf]
        %v291 = vld [vmem:[%s190 + $0xfc] sm:$0xff]
        %v292 = vld [vmem:[%s190 + $0x104] sm:$0xf]
        %v293 = vld [vmem:[%s190 + $0x108] sm:$0xff]
        %v294 = vld [vmem:[%s190 + $0x110] sm:$0xf]
        %v295 = vld [vmem:[%s190 + $0x114] sm:$0xff]
        %v296 = vld [vmem:[%s190 + $0x11c] sm:$0xf]
        %v297 = vld [vmem:[%s190 + $0x120] sm:$0xff]
        %v298 = vld [vmem:[%s190 + $0x128] sm:$0xf]
        %v299 = vld [vmem:[%s190 + $0x12c] sm:$0xff]
        %v300 = vld [vmem:[%s190 + $0x134] sm:$0xf]
        %v301 = vld [vmem:[%s190 + $0x138] sm:$0xff]
        %v302 = vld [vmem:[%s190 + $0x140] sm:$0xf]
        %v303 = vld [vmem:[%s190 + $0x144] sm:$0xff]
        %v304 = vld [vmem:[%s190 + $0x14c] sm:$0xf]
        %v305 = vld [vmem:[%s190 + $0x150] sm:$0xff]
        %v306 = vld [vmem:[%s190 + $0x158] sm:$0xf]
        %v307 = vld [vmem:[%s190 + $0x15c] sm:$0xff]
        %v308 = vld [vmem:[%s190 + $0x164] sm:$0xf]
        %v309 = vld [vmem:[%s190 + $0x168] sm:$0xff]
        %v310 = vld [vmem:[%s190 + $0x170] sm:$0xf]
        %v311 = vld [vmem:[%s190 + $0x174] sm:$0xff]
        %v312 = vld [vmem:[%s190 + $0x17c] sm:$0xf]
        %v313 = vld [vmem:[%s190 + $0x180] sm:$0xff]
        %v314 = vld [vmem:[%s190 + $0x188] sm:$0xf]
        %v315 = vld [vmem:[%s190 + $0x18c] sm:$0xff]
        %v316 = vld [vmem:[%s190 + $0x194] sm:$0xf]
        %v317 = vld [vmem:[%s190 + $0x198] sm:$0xff]
        %v318 = vld [vmem:[%s190 + $0x1a0] sm:$0xf]
        %v319 = vld [vmem:[%s190 + $0x1a4] sm:$0xff]
        %v320 = vld [vmem:[%s190 + $0x1ac] sm:$0xf]
        %v321 = vld [vmem:[%s190 + $0x1b0] sm:$0xff]
        %v322 = vld [vmem:[%s190 + $0x1b8] sm:$0xf]
        %v323 = vld [vmem:[%s190 + $0x1bc] sm:$0xff]
        %v324 = vld [vmem:[%s190 + $0x1c4] sm:$0xf]
        %v325 = vld [vmem:[%s190 + $0x1c8] sm:$0xff]
        %v326 = vld [vmem:[%s190 + $0x1d0] sm:$0xf]
        %v327 = vld [vmem:[%s190 + $0x1d4] sm:$0xff]
        %v328 = vld [vmem:[%s190 + $0x1dc] sm:$0xf]
        %v329 = vld [vmem:[%s190 + $0x1e0] sm:$0xff]
        %v330 = vld [vmem:[%s190 + $0x1e8] sm:$0xf]
        %v331 = vld [vmem:[%s190 + $0x1ec] sm:$0xff]
        %v332 = vld [vmem:[%s190 + $0x1f4] sm:$0xf]
        %v333 = vld [vmem:[%s190 + $0x1f8] sm:$0xff]
        %v334 = vld [vmem:[%s190 + $0x200] sm:$0xf]
        %v335 = vld [vmem:[%s190 + $0x204] sm:$0xff]
        %v336 = vld [vmem:[%s190 + $0x20c] sm:$0xf]
        %v337 = vld [vmem:[%s190 + $0x210] sm:$0xff]
        %v338 = vld [vmem:[%s190 + $0x218] sm:$0xf]
        %v339 = vld [vmem:[%s190 + $0x21c] sm:$0xff]
        %v340 = vld [vmem:[%s190 + $0x224] sm:$0xf]
        %v341 = vld [vmem:[%s190 + $0x228] sm:$0xff]
        %v342 = vld [vmem:[%s190 + $0x230] sm:$0xf]
        %v343 = vld [vmem:[%s190 + $0x234] sm:$0xff]
        %v344 = vld [vmem:[%s190 + $0x23c] sm:$0xf]
        %v377 = vunpack.c.l.b16 %v217
        %v378 = vunpack.c.h.b16 %v217
        %v379 = vunpack.c.l.b16 %v218
        %v380 = vunpack.c.l.b16 %v219
        %v381 = vunpack.c.h.b16 %v219
        %v382 = vunpack.c.l.b16 %v220
        %v383 = vunpack.c.l.b16 %v221
        %v384 = vunpack.c.h.b16 %v221
        %v385 = vunpack.c.l.b16 %v222
        %v386 = vunpack.c.l.b16 %v223
        %v387 = vunpack.c.h.b16 %v223
        %v388 = vunpack.c.l.b16 %v224
        %v389 = vunpack.c.l.b16 %v225
        %v390 = vunpack.c.h.b16 %v225
        %v391 = vunpack.c.l.b16 %v226
        %v392 = vunpack.c.l.b16 %v227
        %v393 = vunpack.c.h.b16 %v227
        %v394 = vunpack.c.l.b16 %v228
        %v395 = vunpack.c.l.b16 %v229
        %v396 = vunpack.c.h.b16 %v229
        %v397 = vunpack.c.l.b16 %v230
        %v398 = vunpack.c.l.b16 %v231
        %v399 = vunpack.c.h.b16 %v231
        %v400 = vunpack.c.l.b16 %v232
        %v401 = vunpack.c.l.b16 %v233
        %v402 = vunpack.c.h.b16 %v233
        %v403 = vunpack.c.l.b16 %v234
        %v404 = vunpack.c.l.b16 %v235
        %v405 = vunpack.c.h.b16 %v235
        %v406 = vunpack.c.l.b16 %v236
        %v407 = vunpack.c.l.b16 %v237
        %v408 = vunpack.c.h.b16 %v237
        %v409 = vunpack.c.l.b16 %v238
        %v410 = vunpack.c.l.b16 %v239
        %v411 = vunpack.c.h.b16 %v239
        %v412 = vunpack.c.l.b16 %v240
        %v413 = vunpack.c.l.b16 %v241
        %v414 = vunpack.c.h.b16 %v241
        %v415 = vunpack.c.l.b16 %v242
        %v416 = vunpack.c.l.b16 %v243
        %v417 = vunpack.c.h.b16 %v243
        %v418 = vunpack.c.l.b16 %v244
        %v419 = vunpack.c.l.b16 %v245
        %v420 = vunpack.c.h.b16 %v245
        %v421 = vunpack.c.l.b16 %v246
        %v422 = vunpack.c.l.b16 %v247
        %v423 = vunpack.c.h.b16 %v247
        %v424 = vunpack.c.l.b16 %v248
        %v425 = vpack.c.b16 %v380, %v377
        %v426 = vpack.c.b16 %v381, %v378
        %v427 = vpack.c.b16 %v382, %v379
        %v428 = vpack.c.b16 %v386, %v383
        %v429 = vpack.c.b16 %v387, %v384
        %v430 = vpack.c.b16 %v388, %v385
        %v431 = vpack.c.b16 %v392, %v389
        %v432 = vpack.c.b16 %v393, %v390
        %v433 = vpack.c.b16 %v394, %v391
        %v434 = vpack.c.b16 %v398, %v395
        %v435 = vpack.c.b16 %v399, %v396
        %v436 = vpack.c.b16 %v400, %v397
        %v437 = vpack.c.b16 %v404, %v401
        %v438 = vpack.c.b16 %v405, %v402
        %v439 = vpack.c.b16 %v406, %v403
        %v440 = vpack.c.b16 %v410, %v407
        %v441 = vpack.c.b16 %v411, %v408
        %v442 = vpack.c.b16 %v412, %v409
        %v443 = vpack.c.b16 %v416, %v413
        %v444 = vpack.c.b16 %v417, %v414
        %v445 = vpack.c.b16 %v418, %v415
        %v446 = vpack.c.b16 %v422, %v419
        %v447 = vpack.c.b16 %v423, %v420
        %v448 = vpack.c.b16 %v424, %v421
        %v569 = vunpack.c.l.b16 %v249
        %v570 = vunpack.c.h.b16 %v249
        %v571 = vunpack.c.l.b16 %v250
        %v572 = vunpack.c.l.b16 %v251
        %v573 = vunpack.c.h.b16 %v251
        %v574 = vunpack.c.l.b16 %v252
        %v575 = vunpack.c.l.b16 %v253
        %v576 = vunpack.c.h.b16 %v253
        %v577 = vunpack.c.l.b16 %v254
        %v578 = vunpack.c.l.b16 %v255
        %v579 = vunpack.c.h.b16 %v255
        %v580 = vunpack.c.l.b16 %v256
        %v581 = vunpack.c.l.b16 %v257
        %v582 = vunpack.c.h.b16 %v257
        %v583 = vunpack.c.l.b16 %v258
        %v584 = vunpack.c.l.b16 %v259
        %v585 = vunpack.c.h.b16 %v259
        %v586 = vunpack.c.l.b16 %v260
        %v587 = vunpack.c.l.b16 %v261
        %v588 = vunpack.c.h.b16 %v261
        %v589 = vunpack.c.l.b16 %v262
        %v590 = vunpack.c.l.b16 %v263
        %v591 = vunpack.c.h.b16 %v263
        %v592 = vunpack.c.l.b16 %v264
        %v593 = vunpack.c.l.b16 %v265
        %v594 = vunpack.c.h.b16 %v265
        %v595 = vunpack.c.l.b16 %v266
        %v596 = vunpack.c.l.b16 %v267
        %v597 = vunpack.c.h.b16 %v267
        %v598 = vunpack.c.l.b16 %v268
        %v599 = vunpack.c.l.b16 %v269
        %v600 = vunpack.c.h.b16 %v269
        %v601 = vunpack.c.l.b16 %v270
        %v602 = vunpack.c.l.b16 %v271
        %v603 = vunpack.c.h.b16 %v271
        %v604 = vunpack.c.l.b16 %v272
        %v605 = vunpack.c.l.b16 %v273
        %v606 = vunpack.c.h.b16 %v273
        %v607 = vunpack.c.l.b16 %v274
        %v608 = vunpack.c.l.b16 %v275
        %v609 = vunpack.c.h.b16 %v275
        %v610 = vunpack.c.l.b16 %v276
        %v611 = vunpack.c.l.b16 %v277
        %v612 = vunpack.c.h.b16 %v277
        %v613 = vunpack.c.l.b16 %v278
        %v614 = vunpack.c.l.b16 %v279
        %v615 = vunpack.c.h.b16 %v279
        %v616 = vunpack.c.l.b16 %v280
        %v617 = vunpack.c.l.b16 %v281
        %v618 = vunpack.c.h.b16 %v281
        %v619 = vunpack.c.l.b16 %v282
        %v620 = vunpack.c.l.b16 %v283
        %v621 = vunpack.c.h.b16 %v283
        %v622 = vunpack.c.l.b16 %v284
        %v623 = vunpack.c.l.b16 %v285
        %v624 = vunpack.c.h.b16 %v285
        %v625 = vunpack.c.l.b16 %v286
        %v626 = vunpack.c.l.b16 %v287
        %v627 = vunpack.c.h.b16 %v287
        %v628 = vunpack.c.l.b16 %v288
        %v629 = vunpack.c.l.b16 %v289
        %v630 = vunpack.c.h.b16 %v289
        %v631 = vunpack.c.l.b16 %v290
        %v632 = vunpack.c.l.b16 %v291
        %v633 = vunpack.c.h.b16 %v291
        %v634 = vunpack.c.l.b16 %v292
        %v635 = vunpack.c.l.b16 %v293
        %v636 = vunpack.c.h.b16 %v293
        %v637 = vunpack.c.l.b16 %v294
        %v638 = vunpack.c.l.b16 %v295
        %v639 = vunpack.c.h.b16 %v295
        %v640 = vunpack.c.l.b16 %v296
        %v641 = vunpack.c.l.b16 %v297
        %v642 = vunpack.c.h.b16 %v297
        %v643 = vunpack.c.l.b16 %v298
        %v644 = vunpack.c.l.b16 %v299
        %v645 = vunpack.c.h.b16 %v299
        %v646 = vunpack.c.l.b16 %v300
        %v647 = vunpack.c.l.b16 %v301
        %v648 = vunpack.c.h.b16 %v301
        %v649 = vunpack.c.l.b16 %v302
        %v650 = vunpack.c.l.b16 %v303
        %v651 = vunpack.c.h.b16 %v303
        %v652 = vunpack.c.l.b16 %v304
        %v653 = vunpack.c.l.b16 %v305
        %v654 = vunpack.c.h.b16 %v305
        %v655 = vunpack.c.l.b16 %v306
        %v656 = vunpack.c.l.b16 %v307
        %v657 = vunpack.c.h.b16 %v307
        %v658 = vunpack.c.l.b16 %v308
        %v659 = vunpack.c.l.b16 %v309
        %v660 = vunpack.c.h.b16 %v309
        %v661 = vunpack.c.l.b16 %v310
        %v662 = vunpack.c.l.b16 %v311
        %v663 = vunpack.c.h.b16 %v311
        %v664 = vunpack.c.l.b16 %v312
        %v665 = vunpack.c.l.b16 %v313
        %v666 = vunpack.c.h.b16 %v313
        %v667 = vunpack.c.l.b16 %v314
        %v668 = vunpack.c.l.b16 %v315
        %v669 = vunpack.c.h.b16 %v315
        %v670 = vunpack.c.l.b16 %v316
        %v671 = vunpack.c.l.b16 %v317
        %v672 = vunpack.c.h.b16 %v317
        %v673 = vunpack.c.l.b16 %v318
        %v674 = vunpack.c.l.b16 %v319
        %v675 = vunpack.c.h.b16 %v319
        %v676 = vunpack.c.l.b16 %v320
        %v677 = vunpack.c.l.b16 %v321
        %v678 = vunpack.c.h.b16 %v321
        %v679 = vunpack.c.l.b16 %v322
        %v680 = vunpack.c.l.b16 %v323
        %v681 = vunpack.c.h.b16 %v323
        %v682 = vunpack.c.l.b16 %v324
        %v683 = vunpack.c.l.b16 %v325
        %v684 = vunpack.c.h.b16 %v325
        %v685 = vunpack.c.l.b16 %v326
        %v686 = vunpack.c.l.b16 %v327
        %v687 = vunpack.c.h.b16 %v327
        %v688 = vunpack.c.l.b16 %v328
        %v689 = vunpack.c.l.b16 %v329
        %v690 = vunpack.c.h.b16 %v329
        %v691 = vunpack.c.l.b16 %v330
        %v692 = vunpack.c.l.b16 %v331
        %v693 = vunpack.c.h.b16 %v331
        %v694 = vunpack.c.l.b16 %v332
        %v695 = vunpack.c.l.b16 %v333
        %v696 = vunpack.c.h.b16 %v333
        %v697 = vunpack.c.l.b16 %v334
        %v698 = vunpack.c.l.b16 %v335
        %v699 = vunpack.c.h.b16 %v335
        %v700 = vunpack.c.l.b16 %v336
        %v701 = vunpack.c.l.b16 %v337
        %v702 = vunpack.c.h.b16 %v337
        %v703 = vunpack.c.l.b16 %v338
        %v704 = vunpack.c.l.b16 %v339
        %v705 = vunpack.c.h.b16 %v339
        %v706 = vunpack.c.l.b16 %v340
        %v707 = vunpack.c.l.b16 %v341
        %v708 = vunpack.c.h.b16 %v341
        %v709 = vunpack.c.l.b16 %v342
        %v710 = vunpack.c.l.b16 %v343
        %v711 = vunpack.c.h.b16 %v343
        %v712 = vunpack.c.l.b16 %v344
        %v713 = vpack.c.b16 %v572, %v569
        %v714 = vpack.c.b16 %v573, %v570
        %v715 = vpack.c.b16 %v574, %v571
        %v716 = vpack.c.b16 %v578, %v575
        %v717 = vpack.c.b16 %v579, %v576
        %v718 = vpack.c.b16 %v580, %v577
        %v719 = vpack.c.b16 %v584, %v581
        %v720 = vpack.c.b16 %v585, %v582
        %v721 = vpack.c.b16 %v586, %v583
        %v722 = vpack.c.b16 %v590, %v587
        %v723 = vpack.c.b16 %v591, %v588
        %v724 = vpack.c.b16 %v592, %v589
        %v725 = vpack.c.b16 %v596, %v593
        %v726 = vpack.c.b16 %v597, %v594
        %v727 = vpack.c.b16 %v598, %v595
        %v728 = vpack.c.b16 %v602, %v599
        %v729 = vpack.c.b16 %v603, %v600
        %v730 = vpack.c.b16 %v604, %v601
        %v731 = vpack.c.b16 %v608, %v605
        %v732 = vpack.c.b16 %v609, %v606
        %v733 = vpack.c.b16 %v610, %v607
        %v734 = vpack.c.b16 %v614, %v611
        %v735 = vpack.c.b16 %v615, %v612
        %v736 = vpack.c.b16 %v616, %v613
        %v737 = vpack.c.b16 %v620, %v617
        %v738 = vpack.c.b16 %v621, %v618
        %v739 = vpack.c.b16 %v622, %v619
        %v740 = vpack.c.b16 %v626, %v623
        %v741 = vpack.c.b16 %v627, %v624
        %v742 = vpack.c.b16 %v628, %v625
        %v743 = vpack.c.b16 %v632, %v629
        %v744 = vpack.c.b16 %v633, %v630
        %v745 = vpack.c.b16 %v634, %v631
        %v746 = vpack.c.b16 %v638, %v635
        %v747 = vpack.c.b16 %v639, %v636
        %v748 = vpack.c.b16 %v640, %v637
        %v749 = vpack.c.b16 %v644, %v641
        %v750 = vpack.c.b16 %v645, %v642
        %v751 = vpack.c.b16 %v646, %v643
        %v752 = vpack.c.b16 %v650, %v647
        %v753 = vpack.c.b16 %v651, %v648
        %v754 = vpack.c.b16 %v652, %v649
        %v755 = vpack.c.b16 %v656, %v653
        %v756 = vpack.c.b16 %v657, %v654
        %v757 = vpack.c.b16 %v658, %v655
        %v758 = vpack.c.b16 %v662, %v659
        %v759 = vpack.c.b16 %v663, %v660
        %v760 = vpack.c.b16 %v664, %v661
        %v761 = vpack.c.b16 %v668, %v665
        %v762 = vpack.c.b16 %v669, %v666
        %v763 = vpack.c.b16 %v670, %v667
        %v764 = vpack.c.b16 %v674, %v671
        %v765 = vpack.c.b16 %v675, %v672
        %v766 = vpack.c.b16 %v676, %v673
        %v767 = vpack.c.b16 %v680, %v677
        %v768 = vpack.c.b16 %v681, %v678
        %v769 = vpack.c.b16 %v682, %v679
        %v770 = vpack.c.b16 %v686, %v683
        %v771 = vpack.c.b16 %v687, %v684
        %v772 = vpack.c.b16 %v688, %v685
        %v773 = vpack.c.b16 %v692, %v689
        %v774 = vpack.c.b16 %v693, %v690
        %v775 = vpack.c.b16 %v694, %v691
        %v776 = vpack.c.b16 %v698, %v695
        %v777 = vpack.c.b16 %v699, %v696
        %v778 = vpack.c.b16 %v700, %v697
        %v779 = vpack.c.b16 %v704, %v701
        %v780 = vpack.c.b16 %v705, %v702
        %v781 = vpack.c.b16 %v706, %v703
        %v782 = vpack.c.b16 %v710, %v707
        %v783 = vpack.c.b16 %v711, %v708
        %v784 = vpack.c.b16 %v712, %v709
        %857 = vmatprep.subr.bf16.mxu0 %v714
        %858 = vmatpush1.bf16.msra.mxu0 %v713
        %859 = vmatprep.subr.bf16.mxu0 %v717
        %860 = vmatpush1.bf16.msra.mxu0 %v716
        %861 = vmatprep.subr.bf16.mxu0 %v720
        %862 = vmatpush1.bf16.msra.mxu0 %v719
        %863 = vmatprep.subr.bf16.mxu0 %v723
        %864 = vmatpush1.bf16.msra.mxu0 %v722
        %865 = vmatprep.subr.bf16.mxu0 %v726
        %866 = vmatpush1.bf16.msra.mxu0 %v725
        %867 = vmatprep.subr.bf16.mxu0 %v729
        %868 = vmatpush1.bf16.msra.mxu0 %v728
        %869 = vmatprep.subr.bf16.mxu0 %v732
        %870 = vmatpush1.bf16.msra.mxu0 %v731
        %871 = vmatprep.subr.bf16.mxu0 %v735
        %872 = vmatpush1.bf16.msra.mxu0 %v734
        %873 = vmatprep.subr.bf16.mxu0 %v738
        %874 = vmatpush1.bf16.msra.mxu0 %v737
        %875 = vmatprep.subr.bf16.mxu0 %v741
        %876 = vmatpush1.bf16.msra.mxu0 %v740
        %877 = vmatprep.subr.bf16.mxu0 %v744
        %878 = vmatpush1.bf16.msra.mxu0 %v743
        %879 = vmatprep.subr.bf16.mxu0 %v747
        %880 = vmatpush1.bf16.msra.mxu0 %v746
        %881 = vmatprep.subr.bf16.mxu0 %v750
        %882 = vmatpush1.bf16.msra.mxu0 %v749
        %883 = vmatprep.subr.bf16.mxu0 %v753
        %884 = vmatpush1.bf16.msra.mxu0 %v752
        %885 = vmatprep.subr.bf16.mxu0 %v756
        %886 = vmatpush1.bf16.msra.mxu0 %v755
        %887 = vmatprep.subr.bf16.mxu0 %v759
        %888 = vmatpush1.bf16.msra.mxu0 %v758
        %889 = vmatprep.mubr.bf16.mxu0 %v426
        %890 = vmatmul.mubr.bf16.gmra.mrb[0].mxu0 %v425
        %v891 = vpop.f32.mrb[0].mxu0
        %v892 = vadd.f32 0.0, %v891
        %v893 = vpop.f32.mrb[0].mxu0
        %v894 = vadd.f32 0.0, %v893
        %v895 = vpop.f32.mrb[0].mxu0
        %v896 = vadd.f32 0.0, %v895
        %v897 = vpop.f32.mrb[0].mxu0
        %v898 = vadd.f32 0.0, %v897
        %899 = vmatprep.mubr.bf16.mxu0 %v429
        %900 = vmatmul.mubr.bf16.gmra.mrb[0].mxu0 %v428
        %v901 = vpop.f32.mrb[0].mxu0
        %v902 = vadd.f32 0.0, %v901
        %v903 = vpop.f32.mrb[0].mxu0
        %v904 = vadd.f32 0.0, %v903
        %v905 = vpop.f32.mrb[0].mxu0
        %v906 = vadd.f32 0.0, %v905
        %v907 = vpop.f32.mrb[0].mxu0
        %v908 = vadd.f32 0.0, %v907
        %909 = vmatprep.mubr.bf16.mxu0 %v432
        %910 = vmatmul.mubr.bf16.gmra.mrb[0].mxu0 %v431
        %v911 = vpop.f32.mrb[0].mxu0
        %v912 = vadd.f32 0.0, %v911
        %v913 = vpop.f32.mrb[0].mxu0
        %v914 = vadd.f32 0.0, %v913
        %v915 = vpop.f32.mrb[0].mxu0
        %v916 = vadd.f32 0.0, %v915
        %v917 = vpop.f32.mrb[0].mxu0
        %v918 = vadd.f32 0.0, %v917
        %919 = vmatprep.mubr.bf16.mxu0 %v435
        %920 = vmatmul.mubr.bf16.gmra.mrb[0].mxu0 %v434
        %v921 = vpop.f32.mrb[0].mxu0
        %v922 = vadd.f32 0.0, %v921
        %v923 = vpop.f32.mrb[0].mxu0
        %v924 = vadd.f32 0.0, %v923
        %v925 = vpop.f32.mrb[0].mxu0
        %v926 = vadd.f32 0.0, %v925
        %v927 = vpop.f32.mrb[0].mxu0
        %v928 = vadd.f32 0.0, %v927
        %929 = vmatprep.mubr.bf16.mxu0 %v438
        %930 = vmatmul.mubr.bf16.gmra.mrb[0].mxu0 %v437
        %v931 = vpop.f32.mrb[0].mxu0
        %v932 = vadd.f32 0.0, %v931
        %v933 = vpop.f32.mrb[0].mxu0
        %v934 = vadd.f32 0.0, %v933
        %v935 = vpop.f32.mrb[0].mxu0
        %v936 = vadd.f32 0.0, %v935
        %v937 = vpop.f32.mrb[0].mxu0
        %v938 = vadd.f32 0.0, %v937
        %939 = vmatprep.mubr.bf16.mxu0 %v441
        %940 = vmatmul.mubr.bf16.gmra.mrb[0].mxu0 %v440
        %v941 = vpop.f32.mrb[0].mxu0
        %v942 = vadd.f32 0.0, %v941
        %v943 = vpop.f32.mrb[0].mxu0
        %v944 = vadd.f32 0.0, %v943
        %v945 = vpop.f32.mrb[0].mxu0
        %v946 = vadd.f32 0.0, %v945
        %v947 = vpop.f32.mrb[0].mxu0
        %v948 = vadd.f32 0.0, %v947
        %949 = vmatprep.mubr.bf16.mxu0 %v444
        %950 = vmatmul.mubr.bf16.gmra.mrb[0].mxu0 %v443
        %v951 = vpop.f32.mrb[0].mxu0
        %v952 = vadd.f32 0.0, %v951
        %v953 = vpop.f32.mrb[0].mxu0
        %v954 = vadd.f32 0.0, %v953
        %v955 = vpop.f32.mrb[0].mxu0
        %v956 = vadd.f32 0.0, %v955
        %v957 = vpop.f32.mrb[0].mxu0
        %v958 = vadd.f32 0.0, %v957
        %959 = vmatprep.mubr.bf16.mxu0 %v447
        %960 = vmatmul.mubr.bf16.gmra.mrb[0].mxu0 %v446
        %v961 = vpop.f32.mrb[0].mxu0
        %v962 = vadd.f32 0.0, %v961
        %v963 = vpop.f32.mrb[0].mxu0
        %v964 = vadd.f32 0.0, %v963
        %v965 = vpop.f32.mrb[0].mxu0
        %v966 = vadd.f32 0.0, %v965
        %v967 = vpop.f32.mrb[0].mxu0
        %v968 = vadd.f32 0.0, %v967
        %969 = vdwg.mxu0
        %970 = vmatprep.subr.bf16.mxu0 %v762
        %971 = vmatpush1.bf16.msra.mxu0 %v761
        %972 = vmatprep.subr.bf16.mxu0 %v765
        %973 = vmatpush1.bf16.msra.mxu0 %v764
        %974 = vmatprep.subr.bf16.mxu0 %v768
        %975 = vmatpush1.bf16.msra.mxu0 %v767
        %976 = vmatprep.subr.bf16.mxu0 %v771
        %977 = vmatpush1.bf16.msra.mxu0 %v770
        %978 = vmatprep.subr.bf16.mxu0 %v774
        %979 = vmatpush1.bf16.msra.mxu0 %v773
        %980 = vmatprep.subr.bf16.mxu0 %v777
        %981 = vmatpush1.bf16.msra.mxu0 %v776
        %982 = vmatprep.subr.bf16.mxu0 %v780
        %983 = vmatpush1.bf16.msra.mxu0 %v779
        %984 = vmatprep.subr.bf16.mxu0 %v783
        %985 = vmatpush1.bf16.msra.mxu0 %v782
        %986 = vmatprep.subr.bf16.mxu0 0
        %987 = vmatpush1.bf16.msra.mxu0 0
        %988 = vmatprep.subr.bf16.mxu0 0
        %989 = vmatpush1.bf16.msra.mxu0 0
        %990 = vmatprep.subr.bf16.mxu0 0
        %991 = vmatpush1.bf16.msra.mxu0 0
        %992 = vmatprep.subr.bf16.mxu0 0
        %993 = vmatpush1.bf16.msra.mxu0 0
        %994 = vmatprep.subr.bf16.mxu0 0
        %995 = vmatpush1.bf16.msra.mxu0 0
        %996 = vmatprep.subr.bf16.mxu0 0
        %997 = vmatpush1.bf16.msra.mxu0 0
        %998 = vmatprep.subr.bf16.mxu0 0
        %999 = vmatpush1.bf16.msra.mxu0 0
        %1000 = vmatprep.subr.bf16.mxu0 0
        %1001 = vmatpush1.bf16.msra.mxu0 0
        %1002 = vmatprep.mubr.bf16.mxu0 0
        %1003 = vmatmul.mubr.bf16.gmra.mrb[0].mxu0 %v427
        %v1004 = vpop.f32.mrb[0].mxu0
        %v1005 = vadd.f32 %v892, %v1004
        %v1006 = vpop.f32.mrb[0].mxu0
        %v1007 = vadd.f32 %v894, %v1006
        %v1008 = vpop.f32.mrb[0].mxu0
        %v1009 = vadd.f32 %v896, %v1008
        %v1010 = vpop.f32.mrb[0].mxu0
        %v1011 = vadd.f32 %v898, %v1010
        %1012 = vmatprep.mubr.bf16.mxu0 0
        %1013 = vmatmul.mubr.bf16.gmra.mrb[0].mxu0 %v430
        %v1014 = vpop.f32.mrb[0].mxu0
        %v1015 = vadd.f32 %v902, %v1014
        %v1016 = vpop.f32.mrb[0].mxu0
        %v1017 = vadd.f32 %v904, %v1016
        %v1018 = vpop.f32.mrb[0].mxu0
        %v1019 = vadd.f32 %v906, %v1018
        %v1020 = vpop.f32.mrb[0].mxu0
        %v1021 = vadd.f32 %v908, %v1020
        %1022 = vmatprep.mubr.bf16.mxu0 0
        %1023 = vmatmul.mubr.bf16.gmra.mrb[0].mxu0 %v433
        %v1024 = vpop.f32.mrb[0].mxu0
        %v1025 = vadd.f32 %v912, %v1024
        %v1026 = vpop.f32.mrb[0].mxu0
        %v1027 = vadd.f32 %v914, %v1026
        %v1028 = vpop.f32.mrb[0].mxu0
        %v1029 = vadd.f32 %v916, %v1028
        %v1030 = vpop.f32.mrb[0].mxu0
        %v1031 = vadd.f32 %v918, %v1030
        %1032 = vmatprep.mubr.bf16.mxu0 0
        %1033 = vmatmul.mubr.bf16.gmra.mrb[0].mxu0 %v436
        %v1034 = vpop.f32.mrb[0].mxu0
        %v1035 = vadd.f32 %v922, %v1034
        %v1036 = vpop.f32.mrb[0].mxu0
        %v1037 = vadd.f32 %v924, %v1036
        %v1038 = vpop.f32.mrb[0].mxu0
        %v1039 = vadd.f32 %v926, %v1038
        %v1040 = vpop.f32.mrb[0].mxu0
        %v1041 = vadd.f32 %v928, %v1040
        %1042 = vmatprep.mubr.bf16.mxu0 0
        %1043 = vmatmul.mubr.bf16.gmra.mrb[0].mxu0 %v439
        %v1044 = vpop.f32.mrb[0].mxu0
        %v1045 = vadd.f32 %v932, %v1044
        %v1046 = vpop.f32.mrb[0].mxu0
        %v1047 = vadd.f32 %v934, %v1046
        %v1048 = vpop.f32.mrb[0].mxu0
        %v1049 = vadd.f32 %v936, %v1048
        %v1050 = vpop.f32.mrb[0].mxu0
        %v1051 = vadd.f32 %v938, %v1050
        %1052 = vmatprep.mubr.bf16.mxu0 0
        %1053 = vmatmul.mubr.bf16.gmra.mrb[0].mxu0 %v442
        %v1054 = vpop.f32.mrb[0].mxu0
        %v1055 = vadd.f32 %v942, %v1054
        %v1056 = vpop.f32.mrb[0].mxu0
        %v1057 = vadd.f32 %v944, %v1056
        %v1058 = vpop.f32.mrb[0].mxu0
        %v1059 = vadd.f32 %v946, %v1058
        %v1060 = vpop.f32.mrb[0].mxu0
        %v1061 = vadd.f32 %v948, %v1060
        %1062 = vmatprep.mubr.bf16.mxu0 0
        %1063 = vmatmul.mubr.bf16.gmra.mrb[0].mxu0 %v445
        %v1064 = vpop.f32.mrb[0].mxu0
        %v1065 = vadd.f32 %v952, %v1064
        %v1066 = vpop.f32.mrb[0].mxu0
        %v1067 = vadd.f32 %v954, %v1066
        %v1068 = vpop.f32.mrb[0].mxu0
        %v1069 = vadd.f32 %v956, %v1068
        %v1070 = vpop.f32.mrb[0].mxu0
        %v1071 = vadd.f32 %v958, %v1070
        %1072 = vmatprep.mubr.bf16.mxu0 0
        %1073 = vmatmul.mubr.bf16.gmra.mrb[0].mxu0 %v448
        %v1074 = vpop.f32.mrb[0].mxu0
        %v1075 = vadd.f32 %v962, %v1074
        %v1076 = vpop.f32.mrb[0].mxu0
        %v1077 = vadd.f32 %v964, %v1076
        %v1078 = vpop.f32.mrb[0].mxu0
        %v1079 = vadd.f32 %v966, %v1078
        %v1080 = vpop.f32.mrb[0].mxu0
        %v1081 = vadd.f32 %v968, %v1080
        %1082 = vdwg.mxu0
        %1083 = vmatprep.subr.bf16.mxu0 0
        %1084 = vmatpush1.bf16.msra.mxu0 %v715
        %1085 = vmatprep.subr.bf16.mxu0 0
        %1086 = vmatpush1.bf16.msra.mxu0 %v718
        %1087 = vmatprep.subr.bf16.mxu0 0
        %1088 = vmatpush1.bf16.msra.mxu0 %v721
        %1089 = vmatprep.subr.bf16.mxu0 0
        %1090 = vmatpush1.bf16.msra.mxu0 %v724
        %1091 = vmatprep.subr.bf16.mxu0 0
        %1092 = vmatpush1.bf16.msra.mxu0 %v727
        %1093 = vmatprep.subr.bf16.mxu0 0
        %1094 = vmatpush1.bf16.msra.mxu0 %v730
        %1095 = vmatprep.subr.bf16.mxu0 0
        %1096 = vmatpush1.bf16.msra.mxu0 %v733
        %1097 = vmatprep.subr.bf16.mxu0 0
        %1098 = vmatpush1.bf16.msra.mxu0 %v736
        %1099 = vmatprep.subr.bf16.mxu0 0
        %1100 = vmatpush1.bf16.msra.mxu0 %v739
        %1101 = vmatprep.subr.bf16.mxu0 0
        %1102 = vmatpush1.bf16.msra.mxu0 %v742
        %1103 = vmatprep.subr.bf16.mxu0 0
        %1104 = vmatpush1.bf16.msra.mxu0 %v745
        %1105 = vmatprep.subr.bf16.mxu0 0
        %1106 = vmatpush1.bf16.msra.mxu0 %v748
        %1107 = vmatprep.subr.bf16.mxu0 0
        %1108 = vmatpush1.bf16.msra.mxu0 %v751
        %1109 = vmatprep.subr.bf16.mxu0 0
        %1110 = vmatpush1.bf16.msra.mxu0 %v754
        %1111 = vmatprep.subr.bf16.mxu0 0
        %1112 = vmatpush1.bf16.msra.mxu0 %v757
        %1113 = vmatprep.subr.bf16.mxu0 0
        %1114 = vmatpush1.bf16.msra.mxu0 %v760
        %1115 = vmatprep.mubr.bf16.mxu0 %v426
        %1116 = vmatmul.mubr.bf16.gmra.mrb[0].mxu0 %v425
        %v1117 = vpop.f32.mrb[0].mxu0
        %v1118 = vadd.f32 0.0, %v1117
        %v1119 = vpop.f32.mrb[0].mxu0
        %v1120 = vpop.f32.mrb[0].mxu0
        %v1121 = vadd.f32 0.0, %v1120
        %v1122 = vpop.f32.mrb[0].mxu0
        %1123 = vmatprep.mubr.bf16.mxu0 %v429
        %1124 = vmatmul.mubr.bf16.gmra.mrb[0].mxu0 %v428
        %v1125 = vpop.f32.mrb[0].mxu0
        %v1126 = vadd.f32 0.0, %v1125
        %v1127 = vpop.f32.mrb[0].mxu0
        %v1128 = vpop.f32.mrb[0].mxu0
        %v1129 = vadd.f32 0.0, %v1128
        %v1130 = vpop.f32.mrb[0].mxu0
        %1131 = vmatprep.mubr.bf16.mxu0 %v432
        %1132 = vmatmul.mubr.bf16.gmra.mrb[0].mxu0 %v431
        %v1133 = vpop.f32.mrb[0].mxu0
        %v1134 = vadd.f32 0.0, %v1133
        %v1135 = vpop.f32.mrb[0].mxu0
        %v1136 = vpop.f32.mrb[0].mxu0
        %v1137 = vadd.f32 0.0, %v1136
        %v1138 = vpop.f32.mrb[0].mxu0
        %1139 = vmatprep.mubr.bf16.mxu0 %v435
        %1140 = vmatmul.mubr.bf16.gmra.mrb[0].mxu0 %v434
        %v1141 = vpop.f32.mrb[0].mxu0
        %v1142 = vadd.f32 0.0, %v1141
        %v1143 = vpop.f32.mrb[0].mxu0
        %v1144 = vpop.f32.mrb[0].mxu0
        %v1145 = vadd.f32 0.0, %v1144
        %v1146 = vpop.f32.mrb[0].mxu0
        %1147 = vmatprep.mubr.bf16.mxu0 %v438
        %1148 = vmatmul.mubr.bf16.gmra.mrb[0].mxu0 %v437
        %v1149 = vpop.f32.mrb[0].mxu0
        %v1150 = vadd.f32 0.0, %v1149
        %v1151 = vpop.f32.mrb[0].mxu0
        %v1152 = vpop.f32.mrb[0].mxu0
        %v1153 = vadd.f32 0.0, %v1152
        %v1154 = vpop.f32.mrb[0].mxu0
        %1155 = vmatprep.mubr.bf16.mxu0 %v441
        %1156 = vmatmul.mubr.bf16.gmra.mrb[0].mxu0 %v440
        %v1157 = vpop.f32.mrb[0].mxu0
        %v1158 = vadd.f32 0.0, %v1157
        %v1159 = vpop.f32.mrb[0].mxu0
        %v1160 = vpop.f32.mrb[0].mxu0
        %v1161 = vadd.f32 0.0, %v1160
        %v1162 = vpop.f32.mrb[0].mxu0
        %1163 = vmatprep.mubr.bf16.mxu0 %v444
        %1164 = vmatmul.mubr.bf16.gmra.mrb[0].mxu0 %v443
        %v1165 = vpop.f32.mrb[0].mxu0
        %v1166 = vadd.f32 0.0, %v1165
        %v1167 = vpop.f32.mrb[0].mxu0
        %v1168 = vpop.f32.mrb[0].mxu0
        %v1169 = vadd.f32 0.0, %v1168
        %v1170 = vpop.f32.mrb[0].mxu0
        %1171 = vmatprep.mubr.bf16.mxu0 %v447
        %1172 = vmatmul.mubr.bf16.gmra.mrb[0].mxu0 %v446
        %v1173 = vpop.f32.mrb[0].mxu0
        %v1174 = vadd.f32 0.0, %v1173
        %v1175 = vpop.f32.mrb[0].mxu0
        %v1176 = vpop.f32.mrb[0].mxu0
        %v1177 = vadd.f32 0.0, %v1176
        %v1178 = vpop.f32.mrb[0].mxu0
        %1179 = vdwg.mxu0
        %1180 = vmatprep.subr.bf16.mxu0 0
        %1181 = vmatpush1.bf16.msra.mxu0 %v763
        %1182 = vmatprep.subr.bf16.mxu0 0
        %1183 = vmatpush1.bf16.msra.mxu0 %v766
        %1184 = vmatprep.subr.bf16.mxu0 0
        %1185 = vmatpush1.bf16.msra.mxu0 %v769
        %1186 = vmatprep.subr.bf16.mxu0 0
        %1187 = vmatpush1.bf16.msra.mxu0 %v772
        %1188 = vmatprep.subr.bf16.mxu0 0
        %1189 = vmatpush1.bf16.msra.mxu0 %v775
        %1190 = vmatprep.subr.bf16.mxu0 0
        %1191 = vmatpush1.bf16.msra.mxu0 %v778
        %1192 = vmatprep.subr.bf16.mxu0 0
        %1193 = vmatpush1.bf16.msra.mxu0 %v781
        %1194 = vmatprep.subr.bf16.mxu0 0
        %1195 = vmatpush1.bf16.msra.mxu0 %v784
        %1196 = vmatprep.subr.bf16.mxu0 0
        %1197 = vmatpush1.bf16.msra.mxu0 0
        %1198 = vmatprep.subr.bf16.mxu0 0
        %1199 = vmatpush1.bf16.msra.mxu0 0
        %1200 = vmatprep.subr.bf16.mxu0 0
        %1201 = vmatpush1.bf16.msra.mxu0 0
        %1202 = vmatprep.subr.bf16.mxu0 0
        %1203 = vmatpush1.bf16.msra.mxu0 0
        %1204 = vmatprep.subr.bf16.mxu0 0
        %1205 = vmatpush1.bf16.msra.mxu0 0
        %1206 = vmatprep.subr.bf16.mxu0 0
        %1207 = vmatpush1.bf16.msra.mxu0 0
        %1208 = vmatprep.subr.bf16.mxu0 0
        %1209 = vmatpush1.bf16.msra.mxu0 0
        %1210 = vmatprep.subr.bf16.mxu0 0
        %1211 = vmatpush1.bf16.msra.mxu0 0
        %1212 = vmatprep.mubr.bf16.mxu0 0
        %1213 = vmatmul.mubr.bf16.gmra.mrb[0].mxu0 %v427
        %v1214 = vpop.f32.mrb[0].mxu0
        %v1215 = vadd.f32 %v1118, %v1214
        %v1216 = vpop.f32.mrb[0].mxu0
        %v1217 = vpop.f32.mrb[0].mxu0
        %v1218 = vadd.f32 %v1121, %v1217
        %v1219 = vpop.f32.mrb[0].mxu0
        %1220 = vmatprep.mubr.bf16.mxu0 0
        %1221 = vmatmul.mubr.bf16.gmra.mrb[0].mxu0 %v430
        %v1222 = vpop.f32.mrb[0].mxu0
        %v1223 = vadd.f32 %v1126, %v1222
        %v1224 = vpop.f32.mrb[0].mxu0
        %v1225 = vpop.f32.mrb[0].mxu0
        %v1226 = vadd.f32 %v1129, %v1225
        %v1227 = vpop.f32.mrb[0].mxu0
        %1228 = vmatprep.mubr.bf16.mxu0 0
        %1229 = vmatmul.mubr.bf16.gmra.mrb[0].mxu0 %v433
        %v1230 = vpop.f32.mrb[0].mxu0
        %v1231 = vadd.f32 %v1134, %v1230
        %v1232 = vpop.f32.mrb[0].mxu0
        %v1233 = vpop.f32.mrb[0].mxu0
        %v1234 = vadd.f32 %v1137, %v1233
        %v1235 = vpop.f32.mrb[0].mxu0
        %1236 = vmatprep.mubr.bf16.mxu0 0
        %1237 = vmatmul.mubr.bf16.gmra.mrb[0].mxu0 %v436
        %v1238 = vpop.f32.mrb[0].mxu0
        %v1239 = vadd.f32 %v1142, %v1238
        %v1240 = vpop.f32.mrb[0].mxu0
        %v1241 = vpop.f32.mrb[0].mxu0
        %v1242 = vadd.f32 %v1145, %v1241
        %v1243 = vpop.f32.mrb[0].mxu0
        %1244 = vmatprep.mubr.bf16.mxu0 0
        %1245 = vmatmul.mubr.bf16.gmra.mrb[0].mxu0 %v439
        %v1246 = vpop.f32.mrb[0].mxu0
        %v1247 = vadd.f32 %v1150, %v1246
        %v1248 = vpop.f32.mrb[0].mxu0
        %v1249 = vpop.f32.mrb[0].mxu0
        %v1250 = vadd.f32 %v1153, %v1249
        %v1251 = vpop.f32.mrb[0].mxu0
        %1252 = vmatprep.mubr.bf16.mxu0 0
        %1253 = vmatmul.mubr.bf16.gmra.mrb[0].mxu0 %v442
        %v1254 = vpop.f32.mrb[0].mxu0
        %v1255 = vadd.f32 %v1158, %v1254
        %v1256 = vpop.f32.mrb[0].mxu0
        %v1257 = vpop.f32.mrb[0].mxu0
        %v1258 = vadd.f32 %v1161, %v1257
        %v1259 = vpop.f32.mrb[0].mxu0
        %1260 = vmatprep.mubr.bf16.mxu0 0
        %1261 = vmatmul.mubr.bf16.gmra.mrb[0].mxu0 %v445
        %v1262 = vpop.f32.mrb[0].mxu0
        %v1263 = vadd.f32 %v1166, %v1262
        %v1264 = vpop.f32.mrb[0].mxu0
        %v1265 = vpop.f32.mrb[0].mxu0
        %v1266 = vadd.f32 %v1169, %v1265
        %v1267 = vpop.f32.mrb[0].mxu0
        %1268 = vmatprep.mubr.bf16.mxu0 0
        %1269 = vmatmul.mubr.bf16.gmra.mrb[0].mxu0 %v448
        %v1270 = vpop.f32.mrb[0].mxu0
        %v1271 = vadd.f32 %v1174, %v1270
        %v1272 = vpop.f32.mrb[0].mxu0
        %v1273 = vpop.f32.mrb[0].mxu0
        %v1274 = vadd.f32 %v1177, %v1273
        %v1275 = vpop.f32.mrb[0].mxu0
        %1276 = vdwg.mxu0
        %v1277 = vlaneseq
        %v1278 = vshrl.u32 %v1277, 7
        %v1279 = vadd.s32 %v1278, 8
        %v1280 = vadd.s32 %v1278, 16
        %v1281 = vadd.s32 %v1278, 24
        %v1282 = vadd.s32 %v1278, 32
        %v1283 = vadd.s32 %v1278, 40
        %v1284 = vadd.s32 %v1278, 48
        %v1285 = vadd.s32 %v1278, 56
        %v1286 = vadd.s32 %v1278, 64
        %v1287 = vadd.s32 %v1278, 72
        %v1288 = vadd.s32 %v1278, 80
        %v1289 = vadd.s32 %v1278, 88
        %v1290 = vadd.s32 %v1278, 96
        %v1291 = vadd.s32 %v1278, 104
        %v1292 = vadd.s32 %v1278, 112
        %v1293 = vadd.s32 %v1278, 120
        %v1294 = vlaneseq
        %v1295 = vand.u32 %v1294, 127
        %vm1296 = vcmp.le.s32.totalorder %v1295, %v1278
        %vm1297 = vcmp.le.s32.totalorder %v1295, %v1279
        %vm1298 = vcmp.le.s32.totalorder %v1295, %v1280
        %vm1299 = vcmp.le.s32.totalorder %v1295, %v1281
        %vm1300 = vcmp.le.s32.totalorder %v1295, %v1282
        %vm1301 = vcmp.le.s32.totalorder %v1295, %v1283
        %vm1302 = vcmp.le.s32.totalorder %v1295, %v1284
        %vm1303 = vcmp.le.s32.totalorder %v1295, %v1285
        %vm1304 = vcmp.le.s32.totalorder %v1295, %v1286
        %vm1305 = vcmp.le.s32.totalorder %v1295, %v1287
        %vm1306 = vcmp.le.s32.totalorder %v1295, %v1288
        %vm1307 = vcmp.le.s32.totalorder %v1295, %v1289
        %vm1308 = vcmp.le.s32.totalorder %v1295, %v1290
        %vm1309 = vcmp.le.s32.totalorder %v1295, %v1291
        %vm1310 = vcmp.le.s32.totalorder %v1295, %v1292
        %vm1311 = vcmp.le.s32.totalorder %v1295, %v1293
        %vm1312 = vcmask 523264
        %v1314 = vsel %vm1312, %v1005, 0
        %v1317 = vsel %vm1312, %v1009, 0
        %v1320 = vsel %vm1312, %v1015, 0
        %v1323 = vsel %vm1312, %v1019, 0
        %v1326 = vsel %vm1312, %v1025, 0
        %v1329 = vsel %vm1312, %v1029, 0
        %v1332 = vsel %vm1312, %v1035, 0
        %v1335 = vsel %vm1312, %v1039, 0
        %v1338 = vsel %vm1312, %v1045, 0
        %v1341 = vsel %vm1312, %v1049, 0
        %v1344 = vsel %vm1312, %v1055, 0
        %v1347 = vsel %vm1312, %v1059, 0
        %v1350 = vsel %vm1312, %v1065, 0
        %v1353 = vsel %vm1312, %v1069, 0
        %v1356 = vsel %vm1312, %v1075, 0
        %v1359 = vsel %vm1312, %v1079, 0
        %v1362 = vsel %vm1312, %v1007, 0
        %v1365 = vsel %vm1312, %v1011, 0
        %v1368 = vsel %vm1312, %v1017, 0
        %v1371 = vsel %vm1312, %v1021, 0
        %v1374 = vsel %vm1312, %v1027, 0
        %v1377 = vsel %vm1312, %v1031, 0
        %v1380 = vsel %vm1312, %v1037, 0
        %v1383 = vsel %vm1312, %v1041, 0
        %v1386 = vsel %vm1312, %v1047, 0
        %v1389 = vsel %vm1312, %v1051, 0
        %v1392 = vsel %vm1312, %v1057, 0
        %v1395 = vsel %vm1312, %v1061, 0
        %v1398 = vsel %vm1312, %v1067, 0
        %v1401 = vsel %vm1312, %v1071, 0
        %v1404 = vsel %vm1312, %v1077, 0
        %v1407 = vsel %vm1312, %v1081, 0
        %1409 = vmatprep.subr.mxu0 0.0
        %1410 = vmatpush1.xpose.msra.mxu0 %v1362
        %1411 = vmatprep.subr.mxu0 0.0
        %1412 = vmatpush1.xpose.msra.mxu0 %v1365
        %1413 = vmatprep.subr.mxu0 0.0
        %1414 = vmatpush1.xpose.msra.mxu0 %v1368
        %1415 = vmatprep.subr.mxu0 0.0
        %1416 = vmatpush1.xpose.msra.mxu0 %v1371
        %1417 = vmatprep.subr.mxu0 0.0
        %1418 = vmatpush1.xpose.msra.mxu0 %v1374
        %1419 = vmatprep.subr.mxu0 0.0
        %1420 = vmatpush1.xpose.msra.mxu0 %v1377
        %1421 = vmatprep.subr.mxu0 0.0
        %1422 = vmatpush1.xpose.msra.mxu0 %v1380
        %1423 = vmatprep.subr.mxu0 0.0
        %1424 = vmatpush1.xpose.msra.mxu0 %v1383
        %1425 = vmatprep.subr.mxu0 0.0
        %1426 = vmatpush1.xpose.msra.mxu0 %v1386
        %1427 = vmatprep.subr.mxu0 0.0
        %1428 = vmatpush1.xpose.msra.mxu0 %v1389
        %1429 = vmatprep.subr.mxu0 0.0
        %1430 = vmatpush1.xpose.msra.mxu0 %v1392
        %1431 = vmatprep.subr.mxu0 0.0
        %1432 = vmatpush1.xpose.msra.mxu0 %v1395
        %1433 = vmatprep.subr.mxu0 0.0
        %1434 = vmatpush1.xpose.msra.mxu0 %v1398
        %1435 = vmatprep.subr.mxu0 0.0
        %1436 = vmatpush1.xpose.msra.mxu0 %v1401
        %1437 = vmatprep.subr.mxu0 0.0
        %1438 = vmatpush1.xpose.msra.mxu0 %v1404
        %1439 = vmatprep.subr.mxu0 0.0
        %1440 = vmatpush1.xpose.msra.mxu0 %v1407
        %1441 = vmatprep.subr.mxu0 0.0
        %1442 = vmatpush1.xpose.msra.mxu0 0.0
        %1443 = vmatprep.subr.mxu0 0.0
        %1444 = vmatpush1.xpose.msra.mxu0 0.0
        %1445 = vmatprep.subr.mxu0 0.0
        %1446 = vmatpush1.xpose.msra.mxu0 0.0
        %1447 = vmatprep.subr.mxu0 0.0
        %1448 = vmatpush1.xpose.msra.mxu0 0.0
        %1449 = vmatprep.subr.mxu0 0.0
        %1450 = vmatpush1.xpose.msra.mxu0 0.0
        %1451 = vmatprep.subr.mxu0 0.0
        %1452 = vmatpush1.xpose.msra.mxu0 0.0
        %1453 = vmatprep.subr.mxu0 0.0
        %1454 = vmatpush1.xpose.msra.mxu0 0.0
        %1455 = vmatprep.subr.mxu0 0.0
        %1456 = vmatpush1.xpose.msra.mxu0 0.0
        %1457 = vmatprep.subr.mxu0 0.0
        %1458 = vmatpush1.xpose.msra.mxu0 0.0
        %1459 = vmatprep.subr.mxu0 0.0
        %1460 = vmatpush1.xpose.msra.mxu0 0.0
        %1461 = vmatprep.subr.mxu0 0.0
        %1462 = vmatpush1.xpose.msra.mxu0 0.0
        %1463 = vmatprep.subr.mxu0 0.0
        %1464 = vmatpush1.xpose.msra.mxu0 0.0
        %1465 = vmatprep.subr.mxu0 0.0
        %1466 = vmatpush1.xpose.msra.mxu0 0.0
        %1467 = vmatprep.subr.mxu0 0.0
        %1468 = vmatpush1.xpose.msra.mxu0 0.0
        %1469 = vmatprep.subr.mxu0 0.0
        %1470 = vmatpush1.xpose.msra.mxu0 0.0
        %1471 = vmatprep.subr.mxu0 0.0
        %1472 = vmatpush1.xpose.msra.mxu0 0.0
        %1473 = vmatprep.mubr.f32.mxu0 0.0
        %1474 = vmatmul.mubr.f32.gmra.mrb[0].mxu0 %v1314
        %v1475 = vpop.f32.mrb[0].mxu0
        %v1476 = vadd.f32 0.0, %v1475
        %v1477 = vpop.f32.mrb[0].mxu0
        %1478 = vmatprep.mubr.f32.mxu0 0.0
        %1479 = vmatmul.mubr.f32.gmra.mrb[0].mxu0 %v1317
        %v1480 = vpop.f32.mrb[0].mxu0
        %v1481 = vadd.f32 0.0, %v1480
        %v1482 = vpop.f32.mrb[0].mxu0
        %1483 = vmatprep.mubr.f32.mxu0 0.0
        %1484 = vmatmul.mubr.f32.gmra.mrb[0].mxu0 %v1320
        %v1485 = vpop.f32.mrb[0].mxu0
        %v1486 = vadd.f32 0.0, %v1485
        %v1487 = vpop.f32.mrb[0].mxu0
        %1488 = vmatprep.mubr.f32.mxu0 0.0
        %1489 = vmatmul.mubr.f32.gmra.mrb[0].mxu0 %v1323
        %v1490 = vpop.f32.mrb[0].mxu0
        %v1491 = vadd.f32 0.0, %v1490
        %v1492 = vpop.f32.mrb[0].mxu0
        %1493 = vmatprep.mubr.f32.mxu0 0.0
        %1494 = vmatmul.mubr.f32.gmra.mrb[0].mxu0 %v1326
        %v1495 = vpop.f32.mrb[0].mxu0
        %v1496 = vadd.f32 0.0, %v1495
        %v1497 = vpop.f32.mrb[0].mxu0
        %1498 = vmatprep.mubr.f32.mxu0 0.0
        %1499 = vmatmul.mubr.f32.gmra.mrb[0].mxu0 %v1329
        %v1500 = vpop.f32.mrb[0].mxu0
        %v1501 = vadd.f32 0.0, %v1500
        %v1502 = vpop.f32.mrb[0].mxu0
        %1503 = vmatprep.mubr.f32.mxu0 0.0
        %1504 = vmatmul.mubr.f32.gmra.mrb[0].mxu0 %v1332
        %v1505 = vpop.f32.mrb[0].mxu0
        %v1506 = vadd.f32 0.0, %v1505
        %v1507 = vpop.f32.mrb[0].mxu0
        %1508 = vmatprep.mubr.f32.mxu0 0.0
        %1509 = vmatmul.mubr.f32.gmra.mrb[0].mxu0 %v1335
        %v1510 = vpop.f32.mrb[0].mxu0
        %v1511 = vadd.f32 0.0, %v1510
        %v1512 = vpop.f32.mrb[0].mxu0
        %1513 = vmatprep.mubr.f32.mxu0 0.0
        %1514 = vmatmul.mubr.f32.gmra.mrb[0].mxu0 %v1338
        %v1515 = vpop.f32.mrb[0].mxu0
        %v1516 = vadd.f32 0.0, %v1515
        %v1517 = vpop.f32.mrb[0].mxu0
        %1518 = vmatprep.mubr.f32.mxu0 0.0
        %1519 = vmatmul.mubr.f32.gmra.mrb[0].mxu0 %v1341
        %v1520 = vpop.f32.mrb[0].mxu0
        %v1521 = vadd.f32 0.0, %v1520
        %v1522 = vpop.f32.mrb[0].mxu0
        %1523 = vmatprep.mubr.f32.mxu0 0.0
        %1524 = vmatmul.mubr.f32.gmra.mrb[0].mxu0 %v1344
        %v1525 = vpop.f32.mrb[0].mxu0
        %v1526 = vadd.f32 0.0, %v1525
        %v1527 = vpop.f32.mrb[0].mxu0
        %1528 = vmatprep.mubr.f32.mxu0 0.0
        %1529 = vmatmul.mubr.f32.gmra.mrb[0].mxu0 %v1347
        %v1530 = vpop.f32.mrb[0].mxu0
        %v1531 = vadd.f32 0.0, %v1530
        %v1532 = vpop.f32.mrb[0].mxu0
        %1533 = vmatprep.mubr.f32.mxu0 0.0
        %1534 = vmatmul.mubr.f32.gmra.mrb[0].mxu0 %v1350
        %v1535 = vpop.f32.mrb[0].mxu0
        %v1536 = vadd.f32 0.0, %v1535
        %v1537 = vpop.f32.mrb[0].mxu0
        %1538 = vmatprep.mubr.f32.mxu0 0.0
        %1539 = vmatmul.mubr.f32.gmra.mrb[0].mxu0 %v1353
        %v1540 = vpop.f32.mrb[0].mxu0
        %v1541 = vadd.f32 0.0, %v1540
        %v1542 = vpop.f32.mrb[0].mxu0
        %1543 = vmatprep.mubr.f32.mxu0 0.0
        %1544 = vmatmul.mubr.f32.gmra.mrb[0].mxu0 %v1356
        %v1545 = vpop.f32.mrb[0].mxu0
        %v1546 = vadd.f32 0.0, %v1545
        %v1547 = vpop.f32.mrb[0].mxu0
        %1548 = vmatprep.mubr.f32.mxu0 0.0
        %1549 = vmatmul.mubr.f32.gmra.mrb[0].mxu0 %v1359
        %v1550 = vpop.f32.mrb[0].mxu0
        %v1551 = vadd.f32 0.0, %v1550
        %v1552 = vpop.f32.mrb[0].mxu0
        %1553 = vdwg.mxu0
        %v1554 = vsel %vm1296, %v1476, -inf
        %v1555 = vsel %vm1297, %v1481, -inf
        %v1556 = vsel %vm1298, %v1486, -inf
        %v1557 = vsel %vm1299, %v1491, -inf
        %v1558 = vsel %vm1300, %v1496, -inf
        %v1559 = vsel %vm1301, %v1501, -inf
        %v1560 = vsel %vm1302, %v1506, -inf
        %v1561 = vsel %vm1303, %v1511, -inf
        %v1562 = vsel %vm1304, %v1516, -inf
        %v1563 = vsel %vm1305, %v1521, -inf
        %v1564 = vsel %vm1306, %v1526, -inf
        %v1565 = vsel %vm1307, %v1531, -inf
        %v1566 = vsel %vm1308, %v1536, -inf
        %v1567 = vsel %vm1309, %v1541, -inf
        %v1568 = vsel %vm1310, %v1546, -inf
        %v1569 = vsel %vm1311, %v1551, -inf
        %1570 = vmax.xlane.f32.xlu0 %v1554
        %v1571 = vpop.xlane.xlu0 %1570
        %1572 = vmax.xlane.f32.xlu0 %v1555
        %v1573 = vpop.xlane.xlu0 %1572
        %1574 = vmax.xlane.f32.xlu0 %v1556
        %v1575 = vpop.xlane.xlu0 %1574
        %1576 = vmax.xlane.f32.xlu0 %v1557
        %v1577 = vpop.xlane.xlu0 %1576
        %1578 = vmax.xlane.f32.xlu0 %v1558
        %v1579 = vpop.xlane.xlu0 %1578
        %1580 = vmax.xlane.f32.xlu0 %v1559
        %v1581 = vpop.xlane.xlu0 %1580
        %1582 = vmax.xlane.f32.xlu0 %v1560
        %v1583 = vpop.xlane.xlu0 %1582
        %1584 = vmax.xlane.f32.xlu0 %v1561
        %v1585 = vpop.xlane.xlu0 %1584
        %1586 = vmax.xlane.f32.xlu0 %v1562
        %v1587 = vpop.xlane.xlu0 %1586
        %1588 = vmax.xlane.f32.xlu0 %v1563
        %v1589 = vpop.xlane.xlu0 %1588
        %1590 = vmax.xlane.f32.xlu0 %v1564
        %v1591 = vpop.xlane.xlu0 %1590
        %1592 = vmax.xlane.f32.xlu0 %v1565
        %v1593 = vpop.xlane.xlu0 %1592
        %1594 = vmax.xlane.f32.xlu0 %v1566
        %v1595 = vpop.xlane.xlu0 %1594
        %1596 = vmax.xlane.f32.xlu0 %v1567
        %v1597 = vpop.xlane.xlu0 %1596
        %1598 = vmax.xlane.f32.xlu0 %v1568
        %v1599 = vpop.xlane.xlu0 %1598
        %1600 = vmax.xlane.f32.xlu0 %v1569
        %v1601 = vpop.xlane.xlu0 %1600
        %v1602 = vsub.f32 %v1554, %v1571
        %v1603 = vsub.f32 %v1555, %v1573
        %v1604 = vsub.f32 %v1556, %v1575
        %v1605 = vsub.f32 %v1557, %v1577
        %v1606 = vsub.f32 %v1558, %v1579
        %v1607 = vsub.f32 %v1559, %v1581
        %v1608 = vsub.f32 %v1560, %v1583
        %v1609 = vsub.f32 %v1561, %v1585
        %v1610 = vsub.f32 %v1562, %v1587
        %v1611 = vsub.f32 %v1563, %v1589
        %v1612 = vsub.f32 %v1564, %v1591
        %v1613 = vsub.f32 %v1565, %v1593
        %v1614 = vsub.f32 %v1566, %v1595
        %v1615 = vsub.f32 %v1567, %v1597
        %v1616 = vsub.f32 %v1568, %v1599
        %v1617 = vsub.f32 %v1569, %v1601
        %v1618 = vmul.f32 %v1602, 1.442695
        %v1619 = vpow.pop %v1618
        %v1620 = vmul.f32 %v1603, 1.442695
        %v1621 = vpow.pop %v1620
        %v1622 = vmul.f32 %v1604, 1.442695
        %v1623 = vpow.pop %v1622
        %v1624 = vmul.f32 %v1605, 1.442695
        %v1625 = vpow.pop %v1624
        %v1626 = vmul.f32 %v1606, 1.442695
        %v1627 = vpow.pop %v1626
        %v1628 = vmul.f32 %v1607, 1.442695
        %v1629 = vpow.pop %v1628
        %v1630 = vmul.f32 %v1608, 1.442695
        %v1631 = vpow.pop %v1630
        %v1632 = vmul.f32 %v1609, 1.442695
        %v1633 = vpow.pop %v1632
        %v1634 = vmul.f32 %v1610, 1.442695
        %v1635 = vpow.pop %v1634
        %v1636 = vmul.f32 %v1611, 1.442695
        %v1637 = vpow.pop %v1636
        %v1638 = vmul.f32 %v1612, 1.442695
        %v1639 = vpow.pop %v1638
        %v1640 = vmul.f32 %v1613, 1.442695
        %v1641 = vpow.pop %v1640
        %v1642 = vmul.f32 %v1614, 1.442695
        %v1643 = vpow.pop %v1642
        %v1644 = vmul.f32 %v1615, 1.442695
        %v1645 = vpow.pop %v1644
        %v1646 = vmul.f32 %v1616, 1.442695
        %v1647 = vpow.pop %v1646
        %v1648 = vmul.f32 %v1617, 1.442695
        %v1649 = vpow.pop %v1648
        %1650 = vadd.xlane.f32.xlu0 %v1619
        %v1651 = vpop.xlane.xlu0 %1650
        %1652 = vadd.xlane.f32.xlu0 %v1621
        %v1653 = vpop.xlane.xlu0 %1652
        %1654 = vadd.xlane.f32.xlu0 %v1623
        %v1655 = vpop.xlane.xlu0 %1654
        %1656 = vadd.xlane.f32.xlu0 %v1625
        %v1657 = vpop.xlane.xlu0 %1656
        %1658 = vadd.xlane.f32.xlu0 %v1627
        %v1659 = vpop.xlane.xlu0 %1658
        %1660 = vadd.xlane.f32.xlu0 %v1629
        %v1661 = vpop.xlane.xlu0 %1660
        %1662 = vadd.xlane.f32.xlu0 %v1631
        %v1663 = vpop.xlane.xlu0 %1662
        %1664 = vadd.xlane.f32.xlu0 %v1633
        %v1665 = vpop.xlane.xlu0 %1664
        %1666 = vadd.xlane.f32.xlu0 %v1635
        %v1667 = vpop.xlane.xlu0 %1666
        %1668 = vadd.xlane.f32.xlu0 %v1637
        %v1669 = vpop.xlane.xlu0 %1668
        %1670 = vadd.xlane.f32.xlu0 %v1639
        %v1671 = vpop.xlane.xlu0 %1670
        %1672 = vadd.xlane.f32.xlu0 %v1641
        %v1673 = vpop.xlane.xlu0 %1672
        %1674 = vadd.xlane.f32.xlu0 %v1643
        %v1675 = vpop.xlane.xlu0 %1674
        %1676 = vadd.xlane.f32.xlu0 %v1645
        %v1677 = vpop.xlane.xlu0 %1676
        %1678 = vadd.xlane.f32.xlu0 %v1647
        %v1679 = vpop.xlane.xlu0 %1678
        %1680 = vadd.xlane.f32.xlu0 %v1649
        %v1681 = vpop.xlane.xlu0 %1680
        %v1682 = vrcp.pop %v1651
        %v1683 = vrcp.pop %v1653
        %v1684 = vrcp.pop %v1655
        %v1685 = vrcp.pop %v1657
        %v1686 = vrcp.pop %v1659
        %v1687 = vrcp.pop %v1661
        %v1688 = vrcp.pop %v1663
        %v1689 = vrcp.pop %v1665
        %v1690 = vrcp.pop %v1667
        %v1691 = vrcp.pop %v1669
        %v1692 = vrcp.pop %v1671
        %v1693 = vrcp.pop %v1673
        %v1694 = vrcp.pop %v1675
        %v1695 = vrcp.pop %v1677
        %v1696 = vrcp.pop %v1679
        %v1697 = vrcp.pop %v1681
        %v1698 = vmul.f32 %v1619, %v1682
        %v1699 = vmul.f32 %v1621, %v1683
        %v1700 = vmul.f32 %v1623, %v1684
        %v1701 = vmul.f32 %v1625, %v1685
        %v1702 = vmul.f32 %v1627, %v1686
        %v1703 = vmul.f32 %v1629, %v1687
        %v1704 = vmul.f32 %v1631, %v1688
        %v1705 = vmul.f32 %v1633, %v1689
        %v1706 = vmul.f32 %v1635, %v1690
        %v1707 = vmul.f32 %v1637, %v1691
        %v1708 = vmul.f32 %v1639, %v1692
        %v1709 = vmul.f32 %v1641, %v1693
        %v1710 = vmul.f32 %v1643, %v1694
        %v1711 = vmul.f32 %v1645, %v1695
        %v1712 = vmul.f32 %v1647, %v1696
        %v1713 = vmul.f32 %v1649, %v1697
        %v1714 = vpack.c.bf16 %v1699, %v1698
        %v1715 = vpack.c.bf16 %v1701, %v1700
        %v1716 = vpack.c.bf16 %v1703, %v1702
        %v1717 = vpack.c.bf16 %v1705, %v1704
        %v1718 = vpack.c.bf16 %v1707, %v1706
        %v1719 = vpack.c.bf16 %v1709, %v1708
        %v1720 = vpack.c.bf16 %v1711, %v1710
        %v1721 = vpack.c.bf16 %v1713, %v1712
        %v1722 = vpack.c.bf16 %v1218, %v1215
        %v1723 = vpack.c.bf16 %v1226, %v1223
        %v1724 = vpack.c.bf16 %v1234, %v1231
        %v1725 = vpack.c.bf16 %v1242, %v1239
        %v1726 = vpack.c.bf16 %v1250, %v1247
        %v1727 = vpack.c.bf16 %v1258, %v1255
        %v1728 = vpack.c.bf16 %v1266, %v1263
        %v1729 = vpack.c.bf16 %v1274, %v1271
        %1730 = vmatprep.subr.bf16.mxu0 0
        %1731 = vmatpush1.bf16.msra.mxu0 %v1722
        %1732 = vmatprep.subr.bf16.mxu0 0
        %1733 = vmatpush1.bf16.msra.mxu0 %v1723
        %1734 = vmatprep.subr.bf16.mxu0 0
        %1735 = vmatpush1.bf16.msra.mxu0 %v1724
        %1736 = vmatprep.subr.bf16.mxu0 0
        %1737 = vmatpush1.bf16.msra.mxu0 %v1725
        %1738 = vmatprep.subr.bf16.mxu0 0
        %1739 = vmatpush1.bf16.msra.mxu0 %v1726
        %1740 = vmatprep.subr.bf16.mxu0 0
        %1741 = vmatpush1.bf16.msra.mxu0 %v1727
        %1742 = vmatprep.subr.bf16.mxu0 0
        %1743 = vmatpush1.bf16.msra.mxu0 %v1728
        %1744 = vmatprep.subr.bf16.mxu0 0
        %1745 = vmatpush1.bf16.msra.mxu0 %v1729
        %1746 = vmatprep.subr.bf16.mxu0 0
        %1747 = vmatpush1.bf16.msra.mxu0 0
        %1748 = vmatprep.subr.bf16.mxu0 0
        %1749 = vmatpush1.bf16.msra.mxu0 0
        %1750 = vmatprep.subr.bf16.mxu0 0
        %1751 = vmatpush1.bf16.msra.mxu0 0
        %1752 = vmatprep.subr.bf16.mxu0 0
        %1753 = vmatpush1.bf16.msra.mxu0 0
        %1754 = vmatprep.subr.bf16.mxu0 0
        %1755 = vmatpush1.bf16.msra.mxu0 0
        %1756 = vmatprep.subr.bf16.mxu0 0
        %1757 = vmatpush1.bf16.msra.mxu0 0
        %1758 = vmatprep.subr.bf16.mxu0 0
        %1759 = vmatpush1.bf16.msra.mxu0 0
        %1760 = vmatprep.subr.bf16.mxu0 0
        %1761 = vmatpush1.bf16.msra.mxu0 0
        %1762 = vmatprep.mubr.bf16.mxu0 0
        %1763 = vmatmul.mubr.bf16.gmra.mrb[0].mxu0 %v1714
        %v1764 = vpop.f32.mrb[0].mxu0
        %v1765 = vadd.f32 0.0, %v1764
        %v1766 = vpop.f32.mrb[0].mxu0
        %v1767 = vpop.f32.mrb[0].mxu0
        %v1768 = vadd.f32 0.0, %v1767
        %v1769 = vpop.f32.mrb[0].mxu0
        %1770 = vmatprep.mubr.bf16.mxu0 0
        %1771 = vmatmul.mubr.bf16.gmra.mrb[0].mxu0 %v1715
        %v1772 = vpop.f32.mrb[0].mxu0
        %v1773 = vadd.f32 0.0, %v1772
        %v1774 = vpop.f32.mrb[0].mxu0
        %v1775 = vpop.f32.mrb[0].mxu0
        %v1776 = vadd.f32 0.0, %v1775
        %v1777 = vpop.f32.mrb[0].mxu0
        %1778 = vmatprep.mubr.bf16.mxu0 0
        %1779 = vmatmul.mubr.bf16.gmra.mrb[0].mxu0 %v1716
        %v1780 = vpop.f32.mrb[0].mxu0
        %v1781 = vadd.f32 0.0, %v1780
        %v1782 = vpop.f32.mrb[0].mxu0
        %v1783 = vpop.f32.mrb[0].mxu0
        %v1784 = vadd.f32 0.0, %v1783
        %v1785 = vpop.f32.mrb[0].mxu0
        %1786 = vmatprep.mubr.bf16.mxu0 0
        %1787 = vmatmul.mubr.bf16.gmra.mrb[0].mxu0 %v1717
        %v1788 = vpop.f32.mrb[0].mxu0
        %v1789 = vadd.f32 0.0, %v1788
        %v1790 = vpop.f32.mrb[0].mxu0
        %v1791 = vpop.f32.mrb[0].mxu0
        %v1792 = vadd.f32 0.0, %v1791
        %v1793 = vpop.f32.mrb[0].mxu0
        %1794 = vmatprep.mubr.bf16.mxu0 0
        %1795 = vmatmul.mubr.bf16.gmra.mrb[0].mxu0 %v1718
        %v1796 = vpop.f32.mrb[0].mxu0
        %v1797 = vadd.f32 0.0, %v1796
        %v1798 = vpop.f32.mrb[0].mxu0
        %v1799 = vpop.f32.mrb[0].mxu0
        %v1800 = vadd.f32 0.0, %v1799
        %v1801 = vpop.f32.mrb[0].mxu0
        %1802 = vmatprep.mubr.bf16.mxu0 0
        %1803 = vmatmul.mubr.bf16.gmra.mrb[0].mxu0 %v1719
        %v1804 = vpop.f32.mrb[0].mxu0
        %v1805 = vadd.f32 0.0, %v1804
        %v1806 = vpop.f32.mrb[0].mxu0
        %v1807 = vpop.f32.mrb[0].mxu0
        %v1808 = vadd.f32 0.0, %v1807
        %v1809 = vpop.f32.mrb[0].mxu0
        %1810 = vmatprep.mubr.bf16.mxu0 0
        %1811 = vmatmul.mubr.bf16.gmra.mrb[0].mxu0 %v1720
        %v1812 = vpop.f32.mrb[0].mxu0
        %v1813 = vadd.f32 0.0, %v1812
        %v1814 = vpop.f32.mrb[0].mxu0
        %v1815 = vpop.f32.mrb[0].mxu0
        %v1816 = vadd.f32 0.0, %v1815
        %v1817 = vpop.f32.mrb[0].mxu0
        %1818 = vmatprep.mubr.bf16.mxu0 0
        %1819 = vmatmul.mubr.bf16.gmra.mrb[0].mxu0 %v1721
        %v1820 = vpop.f32.mrb[0].mxu0
        %v1821 = vadd.f32 0.0, %v1820
        %v1822 = vpop.f32.mrb[0].mxu0
        %v1823 = vpop.f32.mrb[0].mxu0
        %v1824 = vadd.f32 0.0, %v1823
        %v1825 = vpop.f32.mrb[0].mxu0
        %1826 = vdwg.mxu0
        %1827 = vrot.lane.b32.xlu0 %v1005, 64
        %v1828 = vpop.permute.xlu0 %1827
        %1829 = vrot.lane.b32.xlu0 %v1009, 64
        %v1830 = vpop.permute.xlu0 %1829
        %1831 = vrot.lane.b32.xlu0 %v1015, 64
        %v1832 = vpop.permute.xlu0 %1831
        %1833 = vrot.lane.b32.xlu0 %v1019, 64
        %v1834 = vpop.permute.xlu0 %1833
        %1835 = vrot.lane.b32.xlu0 %v1025, 64
        %v1836 = vpop.permute.xlu0 %1835
        %1837 = vrot.lane.b32.xlu0 %v1029, 64
        %v1838 = vpop.permute.xlu0 %1837
        %1839 = vrot.lane.b32.xlu0 %v1035, 64
        %v1840 = vpop.permute.xlu0 %1839
        %1841 = vrot.lane.b32.xlu0 %v1039, 64
        %v1842 = vpop.permute.xlu0 %1841
        %1843 = vrot.lane.b32.xlu0 %v1045, 64
        %v1844 = vpop.permute.xlu0 %1843
        %1845 = vrot.lane.b32.xlu0 %v1049, 64
        %v1846 = vpop.permute.xlu0 %1845
        %1847 = vrot.lane.b32.xlu0 %v1055, 64
        %v1848 = vpop.permute.xlu0 %1847
        %1849 = vrot.lane.b32.xlu0 %v1059, 64
        %v1850 = vpop.permute.xlu0 %1849
        %1851 = vrot.lane.b32.xlu0 %v1065, 64
        %v1852 = vpop.permute.xlu0 %1851
        %1853 = vrot.lane.b32.xlu0 %v1069, 64
        %v1854 = vpop.permute.xlu0 %1853
        %1855 = vrot.lane.b32.xlu0 %v1075, 64
        %v1856 = vpop.permute.xlu0 %1855
        %1857 = vrot.lane.b32.xlu0 %v1079, 64
        %v1858 = vpop.permute.xlu0 %1857
        %1859 = vrot.lane.b32.xlu0 %v1007, 64
        %v1860 = vpop.permute.xlu0 %1859
        %1861 = vrot.lane.b32.xlu0 %v1011, 64
        %v1862 = vpop.permute.xlu0 %1861
        %1863 = vrot.lane.b32.xlu0 %v1017, 64
        %v1864 = vpop.permute.xlu0 %1863
        %1865 = vrot.lane.b32.xlu0 %v1021, 64
        %v1866 = vpop.permute.xlu0 %1865
        %1867 = vrot.lane.b32.xlu0 %v1027, 64
        %v1868 = vpop.permute.xlu0 %1867
        %1869 = vrot.lane.b32.xlu0 %v1031, 64
        %v1870 = vpop.permute.xlu0 %1869
        %1871 = vrot.lane.b32.xlu0 %v1037, 64
        %v1872 = vpop.permute.xlu0 %1871
        %1873 = vrot.lane.b32.xlu0 %v1041, 64
        %v1874 = vpop.permute.xlu0 %1873
        %1875 = vrot.lane.b32.xlu0 %v1047, 64
        %v1876 = vpop.permute.xlu0 %1875
        %1877 = vrot.lane.b32.xlu0 %v1051, 64
        %v1878 = vpop.permute.xlu0 %1877
        %1879 = vrot.lane.b32.xlu0 %v1057, 64
        %v1880 = vpop.permute.xlu0 %1879
        %1881 = vrot.lane.b32.xlu0 %v1061, 64
        %v1882 = vpop.permute.xlu0 %1881
        %1883 = vrot.lane.b32.xlu0 %v1067, 64
        %v1884 = vpop.permute.xlu0 %1883
        %1885 = vrot.lane.b32.xlu0 %v1071, 64
        %v1886 = vpop.permute.xlu0 %1885
        %1887 = vrot.lane.b32.xlu0 %v1077, 64
        %v1888 = vpop.permute.xlu0 %1887
        %1889 = vrot.lane.b32.xlu0 %v1081, 64
        %v1890 = vpop.permute.xlu0 %1889
        %v1891 = vsel %vm1312, %v1828, 0
        %v1893 = vsel %vm1312, %v1830, 0
        %v1895 = vsel %vm1312, %v1832, 0
        %v1897 = vsel %vm1312, %v1834, 0
        %v1899 = vsel %vm1312, %v1836, 0
        %v1901 = vsel %vm1312, %v1838, 0
        %v1903 = vsel %vm1312, %v1840, 0
        %v1905 = vsel %vm1312, %v1842, 0
        %v1907 = vsel %vm1312, %v1844, 0
        %v1909 = vsel %vm1312, %v1846, 0
        %v1911 = vsel %vm1312, %v1848, 0
        %v1913 = vsel %vm1312, %v1850, 0
        %v1915 = vsel %vm1312, %v1852, 0
        %v1917 = vsel %vm1312, %v1854, 0
        %v1919 = vsel %vm1312, %v1856, 0
        %v1921 = vsel %vm1312, %v1858, 0
        %v1923 = vsel %vm1312, %v1860, 0
        %v1925 = vsel %vm1312, %v1862, 0
        %v1927 = vsel %vm1312, %v1864, 0
        %v1929 = vsel %vm1312, %v1866, 0
        %v1931 = vsel %vm1312, %v1868, 0
        %v1933 = vsel %vm1312, %v1870, 0
        %v1935 = vsel %vm1312, %v1872, 0
        %v1937 = vsel %vm1312, %v1874, 0
        %v1939 = vsel %vm1312, %v1876, 0
        %v1941 = vsel %vm1312, %v1878, 0
        %v1943 = vsel %vm1312, %v1880, 0
        %v1945 = vsel %vm1312, %v1882, 0
        %v1947 = vsel %vm1312, %v1884, 0
        %v1949 = vsel %vm1312, %v1886, 0
        %v1951 = vsel %vm1312, %v1888, 0
        %v1953 = vsel %vm1312, %v1890, 0
        %1955 = vmatprep.subr.mxu0 0.0
        %1956 = vmatpush1.xpose.msra.mxu0 %v1923
        %1957 = vmatprep.subr.mxu0 0.0
        %1958 = vmatpush1.xpose.msra.mxu0 %v1925
        %1959 = vmatprep.subr.mxu0 0.0
        %1960 = vmatpush1.xpose.msra.mxu0 %v1927
        %1961 = vmatprep.subr.mxu0 0.0
        %1962 = vmatpush1.xpose.msra.mxu0 %v1929
        %1963 = vmatprep.subr.mxu0 0.0
        %1964 = vmatpush1.xpose.msra.mxu0 %v1931
        %1965 = vmatprep.subr.mxu0 0.0
        %1966 = vmatpush1.xpose.msra.mxu0 %v1933
        %1967 = vmatprep.subr.mxu0 0.0
        %1968 = vmatpush1.xpose.msra.mxu0 %v1935
        %1969 = vmatprep.subr.mxu0 0.0
        %1970 = vmatpush1.xpose.msra.mxu0 %v1937
        %1971 = vmatprep.subr.mxu0 0.0
        %1972 = vmatpush1.xpose.msra.mxu0 %v1939
        %1973 = vmatprep.subr.mxu0 0.0
        %1974 = vmatpush1.xpose.msra.mxu0 %v1941
        %1975 = vmatprep.subr.mxu0 0.0
        %1976 = vmatpush1.xpose.msra.mxu0 %v1943
        %1977 = vmatprep.subr.mxu0 0.0
        %1978 = vmatpush1.xpose.msra.mxu0 %v1945
        %1979 = vmatprep.subr.mxu0 0.0
        %1980 = vmatpush1.xpose.msra.mxu0 %v1947
        %1981 = vmatprep.subr.mxu0 0.0
        %1982 = vmatpush1.xpose.msra.mxu0 %v1949
        %1983 = vmatprep.subr.mxu0 0.0
        %1984 = vmatpush1.xpose.msra.mxu0 %v1951
        %1985 = vmatprep.subr.mxu0 0.0
        %1986 = vmatpush1.xpose.msra.mxu0 %v1953
        %1987 = vmatprep.subr.mxu0 0.0
        %1988 = vmatpush1.xpose.msra.mxu0 0.0
        %1989 = vmatprep.subr.mxu0 0.0
        %1990 = vmatpush1.xpose.msra.mxu0 0.0
        %1991 = vmatprep.subr.mxu0 0.0
        %1992 = vmatpush1.xpose.msra.mxu0 0.0
        %1993 = vmatprep.subr.mxu0 0.0
        %1994 = vmatpush1.xpose.msra.mxu0 0.0
        %1995 = vmatprep.subr.mxu0 0.0
        %1996 = vmatpush1.xpose.msra.mxu0 0.0
        %1997 = vmatprep.subr.mxu0 0.0
        %1998 = vmatpush1.xpose.msra.mxu0 0.0
        %1999 = vmatprep.subr.mxu0 0.0
        %2000 = vmatpush1.xpose.msra.mxu0 0.0
        %2001 = vmatprep.subr.mxu0 0.0
        %2002 = vmatpush1.xpose.msra.mxu0 0.0
        %2003 = vmatprep.subr.mxu0 0.0
        %2004 = vmatpush1.xpose.msra.mxu0 0.0
        %2005 = vmatprep.subr.mxu0 0.0
        %2006 = vmatpush1.xpose.msra.mxu0 0.0
        %2007 = vmatprep.subr.mxu0 0.0
        %2008 = vmatpush1.xpose.msra.mxu0 0.0
        %2009 = vmatprep.subr.mxu0 0.0
        %2010 = vmatpush1.xpose.msra.mxu0 0.0
        %2011 = vmatprep.subr.mxu0 0.0
        %2012 = vmatpush1.xpose.msra.mxu0 0.0
        %2013 = vmatprep.subr.mxu0 0.0
        %2014 = vmatpush1.xpose.msra.mxu0 0.0
        %2015 = vmatprep.subr.mxu0 0.0
        %2016 = vmatpush1.xpose.msra.mxu0 0.0
        %2017 = vmatprep.subr.mxu0 0.0
        %2018 = vmatpush1.xpose.msra.mxu0 0.0
        %2019 = vmatprep.mubr.f32.mxu0 0.0
        %2020 = vmatmul.mubr.f32.gmra.mrb[0].mxu0 %v1891
        %v2021 = vpop.f32.mrb[0].mxu0
        %v2022 = vadd.f32 0.0, %v2021
        %v2023 = vpop.f32.mrb[0].mxu0
        %2024 = vmatprep.mubr.f32.mxu0 0.0
        %2025 = vmatmul.mubr.f32.gmra.mrb[0].mxu0 %v1893
        %v2026 = vpop.f32.mrb[0].mxu0
        %v2027 = vadd.f32 0.0, %v2026
        %v2028 = vpop.f32.mrb[0].mxu0
        %2029 = vmatprep.mubr.f32.mxu0 0.0
        %2030 = vmatmul.mubr.f32.gmra.mrb[0].mxu0 %v1895
        %v2031 = vpop.f32.mrb[0].mxu0
        %v2032 = vadd.f32 0.0, %v2031
        %v2033 = vpop.f32.mrb[0].mxu0
        %2034 = vmatprep.mubr.f32.mxu0 0.0
        %2035 = vmatmul.mubr.f32.gmra.mrb[0].mxu0 %v1897
        %v2036 = vpop.f32.mrb[0].mxu0
        %v2037 = vadd.f32 0.0, %v2036
        %v2038 = vpop.f32.mrb[0].mxu0
        %2039 = vmatprep.mubr.f32.mxu0 0.0
        %2040 = vmatmul.mubr.f32.gmra.mrb[0].mxu0 %v1899
        %v2041 = vpop.f32.mrb[0].mxu0
        %v2042 = vadd.f32 0.0, %v2041
        %v2043 = vpop.f32.mrb[0].mxu0
        %2044 = vmatprep.mubr.f32.mxu0 0.0
        %2045 = vmatmul.mubr.f32.gmra.mrb[0].mxu0 %v1901
        %v2046 = vpop.f32.mrb[0].mxu0
        %v2047 = vadd.f32 0.0, %v2046
        %v2048 = vpop.f32.mrb[0].mxu0
        %2049 = vmatprep.mubr.f32.mxu0 0.0
        %2050 = vmatmul.mubr.f32.gmra.mrb[0].mxu0 %v1903
        %v2051 = vpop.f32.mrb[0].mxu0
        %v2052 = vadd.f32 0.0, %v2051
        %v2053 = vpop.f32.mrb[0].mxu0
        %2054 = vmatprep.mubr.f32.mxu0 0.0
        %2055 = vmatmul.mubr.f32.gmra.mrb[0].mxu0 %v1905
        %v2056 = vpop.f32.mrb[0].mxu0
        %v2057 = vadd.f32 0.0, %v2056
        %v2058 = vpop.f32.mrb[0].mxu0
        %2059 = vmatprep.mubr.f32.mxu0 0.0
        %2060 = vmatmul.mubr.f32.gmra.mrb[0].mxu0 %v1907
        %v2061 = vpop.f32.mrb[0].mxu0
        %v2062 = vadd.f32 0.0, %v2061
        %v2063 = vpop.f32.mrb[0].mxu0
        %2064 = vmatprep.mubr.f32.mxu0 0.0
        %2065 = vmatmul.mubr.f32.gmra.mrb[0].mxu0 %v1909
        %v2066 = vpop.f32.mrb[0].mxu0
        %v2067 = vadd.f32 0.0, %v2066
        %v2068 = vpop.f32.mrb[0].mxu0
        %2069 = vmatprep.mubr.f32.mxu0 0.0
        %2070 = vmatmul.mubr.f32.gmra.mrb[0].mxu0 %v1911
        %v2071 = vpop.f32.mrb[0].mxu0
        %v2072 = vadd.f32 0.0, %v2071
        %v2073 = vpop.f32.mrb[0].mxu0
        %2074 = vmatprep.mubr.f32.mxu0 0.0
        %2075 = vmatmul.mubr.f32.gmra.mrb[0].mxu0 %v1913
        %v2076 = vpop.f32.mrb[0].mxu0
        %v2077 = vadd.f32 0.0, %v2076
        %v2078 = vpop.f32.mrb[0].mxu0
        %2079 = vmatprep.mubr.f32.mxu0 0.0
        %2080 = vmatmul.mubr.f32.gmra.mrb[0].mxu0 %v1915
        %v2081 = vpop.f32.mrb[0].mxu0
        %v2082 = vadd.f32 0.0, %v2081
        %v2083 = vpop.f32.mrb[0].mxu0
        %2084 = vmatprep.mubr.f32.mxu0 0.0
        %2085 = vmatmul.mubr.f32.gmra.mrb[0].mxu0 %v1917
        %v2086 = vpop.f32.mrb[0].mxu0
        %v2087 = vadd.f32 0.0, %v2086
        %v2088 = vpop.f32.mrb[0].mxu0
        %2089 = vmatprep.mubr.f32.mxu0 0.0
        %2090 = vmatmul.mubr.f32.gmra.mrb[0].mxu0 %v1919
        %v2091 = vpop.f32.mrb[0].mxu0
        %v2092 = vadd.f32 0.0, %v2091
        %v2093 = vpop.f32.mrb[0].mxu0
        %2094 = vmatprep.mubr.f32.mxu0 0.0
        %2095 = vmatmul.mubr.f32.gmra.mrb[0].mxu0 %v1921
        %v2096 = vpop.f32.mrb[0].mxu0
        %v2097 = vadd.f32 0.0, %v2096
        %v2098 = vpop.f32.mrb[0].mxu0
        %2099 = vdwg.mxu0
        %v2100 = vsel %vm1296, %v2022, -inf
        %v2101 = vsel %vm1297, %v2027, -inf
        %v2102 = vsel %vm1298, %v2032, -inf
        %v2103 = vsel %vm1299, %v2037, -inf
        %v2104 = vsel %vm1300, %v2042, -inf
        %v2105 = vsel %vm1301, %v2047, -inf
        %v2106 = vsel %vm1302, %v2052, -inf
        %v2107 = vsel %vm1303, %v2057, -inf
        %v2108 = vsel %vm1304, %v2062, -inf
        %v2109 = vsel %vm1305, %v2067, -inf
        %v2110 = vsel %vm1306, %v2072, -inf
        %v2111 = vsel %vm1307, %v2077, -inf
        %v2112 = vsel %vm1308, %v2082, -inf
        %v2113 = vsel %vm1309, %v2087, -inf
        %v2114 = vsel %vm1310, %v2092, -inf
        %v2115 = vsel %vm1311, %v2097, -inf
        %2116 = vmax.xlane.f32.xlu0 %v2100
        %v2117 = vpop.xlane.xlu0 %2116
        %2118 = vmax.xlane.f32.xlu0 %v2101
        %v2119 = vpop.xlane.xlu0 %2118
        %2120 = vmax.xlane.f32.xlu0 %v2102
        %v2121 = vpop.xlane.xlu0 %2120
        %2122 = vmax.xlane.f32.xlu0 %v2103
        %v2123 = vpop.xlane.xlu0 %2122
        %2124 = vmax.xlane.f32.xlu0 %v2104
        %v2125 = vpop.xlane.xlu0 %2124
        %2126 = vmax.xlane.f32.xlu0 %v2105
        %v2127 = vpop.xlane.xlu0 %2126
        %2128 = vmax.xlane.f32.xlu0 %v2106
        %v2129 = vpop.xlane.xlu0 %2128
        %2130 = vmax.xlane.f32.xlu0 %v2107
        %v2131 = vpop.xlane.xlu0 %2130
        %2132 = vmax.xlane.f32.xlu0 %v2108
        %v2133 = vpop.xlane.xlu0 %2132
        %2134 = vmax.xlane.f32.xlu0 %v2109
        %v2135 = vpop.xlane.xlu0 %2134
        %2136 = vmax.xlane.f32.xlu0 %v2110
        %v2137 = vpop.xlane.xlu0 %2136
        %2138 = vmax.xlane.f32.xlu0 %v2111
        %v2139 = vpop.xlane.xlu0 %2138
        %2140 = vmax.xlane.f32.xlu0 %v2112
        %v2141 = vpop.xlane.xlu0 %2140
        %2142 = vmax.xlane.f32.xlu0 %v2113
        %v2143 = vpop.xlane.xlu0 %2142
        %2144 = vmax.xlane.f32.xlu0 %v2114
        %v2145 = vpop.xlane.xlu0 %2144
        %2146 = vmax.xlane.f32.xlu0 %v2115
        %v2147 = vpop.xlane.xlu0 %2146
        %v2148 = vsub.f32 %v2100, %v2117
        %v2149 = vsub.f32 %v2101, %v2119
        %v2150 = vsub.f32 %v2102, %v2121
        %v2151 = vsub.f32 %v2103, %v2123
        %v2152 = vsub.f32 %v2104, %v2125
        %v2153 = vsub.f32 %v2105, %v2127
        %v2154 = vsub.f32 %v2106, %v2129
        %v2155 = vsub.f32 %v2107, %v2131
        %v2156 = vsub.f32 %v2108, %v2133
        %v2157 = vsub.f32 %v2109, %v2135
        %v2158 = vsub.f32 %v2110, %v2137
        %v2159 = vsub.f32 %v2111, %v2139
        %v2160 = vsub.f32 %v2112, %v2141
        %v2161 = vsub.f32 %v2113, %v2143
        %v2162 = vsub.f32 %v2114, %v2145
        %v2163 = vsub.f32 %v2115, %v2147
        %v2164 = vmul.f32 %v2148, 1.442695
        %v2165 = vpow.pop %v2164
        %v2166 = vmul.f32 %v2149, 1.442695
        %v2167 = vpow.pop %v2166
        %v2168 = vmul.f32 %v2150, 1.442695
        %v2169 = vpow.pop %v2168
        %v2170 = vmul.f32 %v2151, 1.442695
        %v2171 = vpow.pop %v2170
        %v2172 = vmul.f32 %v2152, 1.442695
        %v2173 = vpow.pop %v2172
        %v2174 = vmul.f32 %v2153, 1.442695
        %v2175 = vpow.pop %v2174
        %v2176 = vmul.f32 %v2154, 1.442695
        %v2177 = vpow.pop %v2176
        %v2178 = vmul.f32 %v2155, 1.442695
        %v2179 = vpow.pop %v2178
        %v2180 = vmul.f32 %v2156, 1.442695
        %v2181 = vpow.pop %v2180
        %v2182 = vmul.f32 %v2157, 1.442695
        %v2183 = vpow.pop %v2182
        %v2184 = vmul.f32 %v2158, 1.442695
        %v2185 = vpow.pop %v2184
        %v2186 = vmul.f32 %v2159, 1.442695
        %v2187 = vpow.pop %v2186
        %v2188 = vmul.f32 %v2160, 1.442695
        %v2189 = vpow.pop %v2188
        %v2190 = vmul.f32 %v2161, 1.442695
        %v2191 = vpow.pop %v2190
        %v2192 = vmul.f32 %v2162, 1.442695
        %v2193 = vpow.pop %v2192
        %v2194 = vmul.f32 %v2163, 1.442695
        %v2195 = vpow.pop %v2194
        %2196 = vadd.xlane.f32.xlu0 %v2165
        %v2197 = vpop.xlane.xlu0 %2196
        %2198 = vadd.xlane.f32.xlu0 %v2167
        %v2199 = vpop.xlane.xlu0 %2198
        %2200 = vadd.xlane.f32.xlu0 %v2169
        %v2201 = vpop.xlane.xlu0 %2200
        %2202 = vadd.xlane.f32.xlu0 %v2171
        %v2203 = vpop.xlane.xlu0 %2202
        %2204 = vadd.xlane.f32.xlu0 %v2173
        %v2205 = vpop.xlane.xlu0 %2204
        %2206 = vadd.xlane.f32.xlu0 %v2175
        %v2207 = vpop.xlane.xlu0 %2206
        %2208 = vadd.xlane.f32.xlu0 %v2177
        %v2209 = vpop.xlane.xlu0 %2208
        %2210 = vadd.xlane.f32.xlu0 %v2179
        %v2211 = vpop.xlane.xlu0 %2210
        %2212 = vadd.xlane.f32.xlu0 %v2181
        %v2213 = vpop.xlane.xlu0 %2212
        %2214 = vadd.xlane.f32.xlu0 %v2183
        %v2215 = vpop.xlane.xlu0 %2214
        %2216 = vadd.xlane.f32.xlu0 %v2185
        %v2217 = vpop.xlane.xlu0 %2216
        %2218 = vadd.xlane.f32.xlu0 %v2187
        %v2219 = vpop.xlane.xlu0 %2218
        %2220 = vadd.xlane.f32.xlu0 %v2189
        %v2221 = vpop.xlane.xlu0 %2220
        %2222 = vadd.xlane.f32.xlu0 %v2191
        %v2223 = vpop.xlane.xlu0 %2222
        %2224 = vadd.xlane.f32.xlu0 %v2193
        %v2225 = vpop.xlane.xlu0 %2224
        %2226 = vadd.xlane.f32.xlu0 %v2195
        %v2227 = vpop.xlane.xlu0 %2226
        %v2228 = vrcp.pop %v2197
        %v2229 = vrcp.pop %v2199
        %v2230 = vrcp.pop %v2201
        %v2231 = vrcp.pop %v2203
        %v2232 = vrcp.pop %v2205
        %v2233 = vrcp.pop %v2207
        %v2234 = vrcp.pop %v2209
        %v2235 = vrcp.pop %v2211
        %v2236 = vrcp.pop %v2213
        %v2237 = vrcp.pop %v2215
        %v2238 = vrcp.pop %v2217
        %v2239 = vrcp.pop %v2219
        %v2240 = vrcp.pop %v2221
        %v2241 = vrcp.pop %v2223
        %v2242 = vrcp.pop %v2225
        %v2243 = vrcp.pop %v2227
        %v2244 = vmul.f32 %v2165, %v2228
        %v2245 = vmul.f32 %v2167, %v2229
        %v2246 = vmul.f32 %v2169, %v2230
        %v2247 = vmul.f32 %v2171, %v2231
        %v2248 = vmul.f32 %v2173, %v2232
        %v2249 = vmul.f32 %v2175, %v2233
        %v2250 = vmul.f32 %v2177, %v2234
        %v2251 = vmul.f32 %v2179, %v2235
        %v2252 = vmul.f32 %v2181, %v2236
        %v2253 = vmul.f32 %v2183, %v2237
        %v2254 = vmul.f32 %v2185, %v2238
        %v2255 = vmul.f32 %v2187, %v2239
        %v2256 = vmul.f32 %v2189, %v2240
        %v2257 = vmul.f32 %v2191, %v2241
        %v2258 = vmul.f32 %v2193, %v2242
        %v2259 = vmul.f32 %v2195, %v2243
        %v2260 = vpack.c.bf16 %v2245, %v2244
        %v2261 = vpack.c.bf16 %v2247, %v2246
        %v2262 = vpack.c.bf16 %v2249, %v2248
        %v2263 = vpack.c.bf16 %v2251, %v2250
        %v2264 = vpack.c.bf16 %v2253, %v2252
        %v2265 = vpack.c.bf16 %v2255, %v2254
        %v2266 = vpack.c.bf16 %v2257, %v2256
        %v2267 = vpack.c.bf16 %v2259, %v2258
        %2276 = vrot.lane.b32.xlu0 %v1722, 64
        %v2277 = vpop.permute.xlu0 %2276
        %2278 = vrot.lane.b32.xlu0 %v1723, 64
        %v2279 = vpop.permute.xlu0 %2278
        %2280 = vrot.lane.b32.xlu0 %v1724, 64
        %v2281 = vpop.permute.xlu0 %2280
        %2282 = vrot.lane.b32.xlu0 %v1725, 64
        %v2283 = vpop.permute.xlu0 %2282
        %2284 = vrot.lane.b32.xlu0 %v1726, 64
        %v2285 = vpop.permute.xlu0 %2284
        %2286 = vrot.lane.b32.xlu0 %v1727, 64
        %v2287 = vpop.permute.xlu0 %2286
        %2288 = vrot.lane.b32.xlu0 %v1728, 64
        %v2289 = vpop.permute.xlu0 %2288
        %2290 = vrot.lane.b32.xlu0 %v1729, 64
        %v2291 = vpop.permute.xlu0 %2290
        %2300 = vmatprep.subr.bf16.mxu0 0
        %2301 = vmatpush1.bf16.msra.mxu0 %v2277
        %2302 = vmatprep.subr.bf16.mxu0 0
        %2303 = vmatpush1.bf16.msra.mxu0 %v2279
        %2304 = vmatprep.subr.bf16.mxu0 0
        %2305 = vmatpush1.bf16.msra.mxu0 %v2281
        %2306 = vmatprep.subr.bf16.mxu0 0
        %2307 = vmatpush1.bf16.msra.mxu0 %v2283
        %2308 = vmatprep.subr.bf16.mxu0 0
        %2309 = vmatpush1.bf16.msra.mxu0 %v2285
        %2310 = vmatprep.subr.bf16.mxu0 0
        %2311 = vmatpush1.bf16.msra.mxu0 %v2287
        %2312 = vmatprep.subr.bf16.mxu0 0
        %2313 = vmatpush1.bf16.msra.mxu0 %v2289
        %2314 = vmatprep.subr.bf16.mxu0 0
        %2315 = vmatpush1.bf16.msra.mxu0 %v2291
        %2316 = vmatprep.subr.bf16.mxu0 0
        %2317 = vmatpush1.bf16.msra.mxu0 0
        %2318 = vmatprep.subr.bf16.mxu0 0
        %2319 = vmatpush1.bf16.msra.mxu0 0
        %2320 = vmatprep.subr.bf16.mxu0 0
        %2321 = vmatpush1.bf16.msra.mxu0 0
        %2322 = vmatprep.subr.bf16.mxu0 0
        %2323 = vmatpush1.bf16.msra.mxu0 0
        %2324 = vmatprep.subr.bf16.mxu0 0
        %2325 = vmatpush1.bf16.msra.mxu0 0
        %2326 = vmatprep.subr.bf16.mxu0 0
        %2327 = vmatpush1.bf16.msra.mxu0 0
        %2328 = vmatprep.subr.bf16.mxu0 0
        %2329 = vmatpush1.bf16.msra.mxu0 0
        %2330 = vmatprep.subr.bf16.mxu0 0
        %2331 = vmatpush1.bf16.msra.mxu0 0
        %2332 = vmatprep.mubr.bf16.mxu0 0
        %2333 = vmatmul.mubr.bf16.gmra.mrb[0].mxu0 %v2260
        %v2334 = vpop.f32.mrb[0].mxu0
        %v2335 = vadd.f32 0.0, %v2334
        %v2336 = vpop.f32.mrb[0].mxu0
        %v2337 = vpop.f32.mrb[0].mxu0
        %v2338 = vadd.f32 0.0, %v2337
        %v2339 = vpop.f32.mrb[0].mxu0
        %2340 = vmatprep.mubr.bf16.mxu0 0
        %2341 = vmatmul.mubr.bf16.gmra.mrb[0].mxu0 %v2261
        %v2342 = vpop.f32.mrb[0].mxu0
        %v2343 = vadd.f32 0.0, %v2342
        %v2344 = vpop.f32.mrb[0].mxu0
        %v2345 = vpop.f32.mrb[0].mxu0
        %v2346 = vadd.f32 0.0, %v2345
        %v2347 = vpop.f32.mrb[0].mxu0
        %2348 = vmatprep.mubr.bf16.mxu0 0
        %2349 = vmatmul.mubr.bf16.gmra.mrb[0].mxu0 %v2262
        %v2350 = vpop.f32.mrb[0].mxu0
        %v2351 = vadd.f32 0.0, %v2350
        %v2352 = vpop.f32.mrb[0].mxu0
        %v2353 = vpop.f32.mrb[0].mxu0
        %v2354 = vadd.f32 0.0, %v2353
        %v2355 = vpop.f32.mrb[0].mxu0
        %2356 = vmatprep.mubr.bf16.mxu0 0
        %2357 = vmatmul.mubr.bf16.gmra.mrb[0].mxu0 %v2263
        %v2358 = vpop.f32.mrb[0].mxu0
        %v2359 = vadd.f32 0.0, %v2358
        %v2360 = vpop.f32.mrb[0].mxu0
        %v2361 = vpop.f32.mrb[0].mxu0
        %v2362 = vadd.f32 0.0, %v2361
        %v2363 = vpop.f32.mrb[0].mxu0
        %2364 = vmatprep.mubr.bf16.mxu0 0
        %2365 = vmatmul.mubr.bf16.gmra.mrb[0].mxu0 %v2264
        %v2366 = vpop.f32.mrb[0].mxu0
        %v2367 = vadd.f32 0.0, %v2366
        %v2368 = vpop.f32.mrb[0].mxu0
        %v2369 = vpop.f32.mrb[0].mxu0
        %v2370 = vadd.f32 0.0, %v2369
        %v2371 = vpop.f32.mrb[0].mxu0
        %2372 = vmatprep.mubr.bf16.mxu0 0
        %2373 = vmatmul.mubr.bf16.gmra.mrb[0].mxu0 %v2265
        %v2374 = vpop.f32.mrb[0].mxu0
        %v2375 = vadd.f32 0.0, %v2374
        %v2376 = vpop.f32.mrb[0].mxu0
        %v2377 = vpop.f32.mrb[0].mxu0
        %v2378 = vadd.f32 0.0, %v2377
        %v2379 = vpop.f32.mrb[0].mxu0
        %2380 = vmatprep.mubr.bf16.mxu0 0
        %2381 = vmatmul.mubr.bf16.gmra.mrb[0].mxu0 %v2266
        %v2382 = vpop.f32.mrb[0].mxu0
        %v2383 = vadd.f32 0.0, %v2382
        %v2384 = vpop.f32.mrb[0].mxu0
        %v2385 = vpop.f32.mrb[0].mxu0
        %v2386 = vadd.f32 0.0, %v2385
        %v2387 = vpop.f32.mrb[0].mxu0
        %2388 = vmatprep.mubr.bf16.mxu0 0
        %2389 = vmatmul.mubr.bf16.gmra.mrb[0].mxu0 %v2267
        %v2390 = vpop.f32.mrb[0].mxu0
        %v2391 = vadd.f32 0.0, %v2390
        %v2392 = vpop.f32.mrb[0].mxu0
        %v2393 = vpop.f32.mrb[0].mxu0
        %v2394 = vadd.f32 0.0, %v2393
        %v2395 = vpop.f32.mrb[0].mxu0
        %2396 = vdwg.mxu0
        %2413 = vrot.lane.b32.xlu0 %v2335, 64
        %v2414 = vpop.permute.xlu0 %2413
        %2415 = vrot.lane.b32.xlu0 %v2338, 64
        %v2416 = vpop.permute.xlu0 %2415
        %2417 = vrot.lane.b32.xlu0 %v2343, 64
        %v2418 = vpop.permute.xlu0 %2417
        %2419 = vrot.lane.b32.xlu0 %v2346, 64
        %v2420 = vpop.permute.xlu0 %2419
        %2421 = vrot.lane.b32.xlu0 %v2351, 64
        %v2422 = vpop.permute.xlu0 %2421
        %2423 = vrot.lane.b32.xlu0 %v2354, 64
        %v2424 = vpop.permute.xlu0 %2423
        %2425 = vrot.lane.b32.xlu0 %v2359, 64
        %v2426 = vpop.permute.xlu0 %2425
        %2427 = vrot.lane.b32.xlu0 %v2362, 64
        %v2428 = vpop.permute.xlu0 %2427
        %2429 = vrot.lane.b32.xlu0 %v2367, 64
        %v2430 = vpop.permute.xlu0 %2429
        %2431 = vrot.lane.b32.xlu0 %v2370, 64
        %v2432 = vpop.permute.xlu0 %2431
        %2433 = vrot.lane.b32.xlu0 %v2375, 64
        %v2434 = vpop.permute.xlu0 %2433
        %2435 = vrot.lane.b32.xlu0 %v2378, 64
        %v2436 = vpop.permute.xlu0 %2435
        %2437 = vrot.lane.b32.xlu0 %v2383, 64
        %v2438 = vpop.permute.xlu0 %2437
        %2439 = vrot.lane.b32.xlu0 %v2386, 64
        %v2440 = vpop.permute.xlu0 %2439
        %2441 = vrot.lane.b32.xlu0 %v2391, 64
        %v2442 = vpop.permute.xlu0 %2441
        %2443 = vrot.lane.b32.xlu0 %v2394, 64
        %v2444 = vpop.permute.xlu0 %2443
        %v2461 = vsel %vm1312, %v1765, %v2414
        %v2462 = vsel %vm1312, %v1768, %v2416
        %v2463 = vsel %vm1312, %v1773, %v2418
        %v2464 = vsel %vm1312, %v1776, %v2420
        %v2465 = vsel %vm1312, %v1781, %v2422
        %v2466 = vsel %vm1312, %v1784, %v2424
        %v2467 = vsel %vm1312, %v1789, %v2426
        %v2468 = vsel %vm1312, %v1792, %v2428
        %v2469 = vsel %vm1312, %v1797, %v2430
        %v2470 = vsel %vm1312, %v1800, %v2432
        %v2471 = vsel %vm1312, %v1805, %v2434
        %v2472 = vsel %vm1312, %v1808, %v2436
        %v2473 = vsel %vm1312, %v1813, %v2438
        %v2474 = vsel %vm1312, %v1816, %v2440
        %v2475 = vsel %vm1312, %v1821, %v2442
        %v2476 = vsel %vm1312, %v1824, %v2444
        %2477 = vst [vmem:[%s215] sm:$0xff] %v2461
        %2478 = vst [vmem:[%s215 + $0x8] sm:$0xff] %v2462
        %2479 = vst [vmem:[%s215 + $0x10] sm:$0xff] %v2463
        %2480 = vst [vmem:[%s215 + $0x18] sm:$0xff] %v2464
        %2481 = vst [vmem:[%s215 + $0x20] sm:$0xff] %v2465
        %2482 = vst [vmem:[%s215 + $0x28] sm:$0xff] %v2466
        %2483 = vst [vmem:[%s215 + $0x30] sm:$0xff] %v2467
        %2484 = vst [vmem:[%s215 + $0x38] sm:$0xff] %v2468
        %2485 = vst [vmem:[%s215 + $0x40] sm:$0xff] %v2469
        %2486 = vst [vmem:[%s215 + $0x48] sm:$0xff] %v2470
        %2487 = vst [vmem:[%s215 + $0x50] sm:$0xff] %v2471
        %2488 = vst [vmem:[%s215 + $0x58] sm:$0xff] %v2472
        %2489 = vst [vmem:[%s215 + $0x60] sm:$0xff] %v2473
        %2490 = vst [vmem:[%s215 + $0x68] sm:$0xff] %v2474
        %2491 = vst [vmem:[%s215 + $0x70] sm:$0xff] %v2475
        %2492 = vst [vmem:[%s215 + $0x78] sm:$0xff] %v2476
        %s2493 = sand.u32 %s96, 1
        %s2494 = scalar_lea.sflag [#allocation4], %s2493
        %s2495 = sand.u32 %s96, 1
        %s2496 = smul.addr %s2495, 128
        %s2497 = scalar_lea.vmem [#allocation7], %s2496
        // Predicated region
        $region37: #{tpu_custom_call.1} parent=27 // pred_check
          %p2498 = pneg %p106
        $region38: #{tpu_custom_call.1} parent=27 // pred_check_branch
          %2500 = sbr.rel (%p2498) target = $region40
        $region39: #{tpu_custom_call.1} parent=27 // pred_region
          %s2502 = ssub.s32 2048, 2048
          %2503 = vsyncadd %s2494, %s2502
          %s2504 = smul.addr %s26, 48
          %s2505 = sadd.s32 %s27, %s2504
          %s2506 = smul.addr %s2505, 128
          %s2507 = scalar_lea.hbm %s2, %s2506
          %s2508 = sshll.u32 %s2497, 4
          %s2509 = int_to_ptr.vmem [resolvable:$true] %s2508
          %2514 = dma.vmem_to_hbm [thread:$0]  %s2509, 2048, %s2507, %s2494, 128, 384, 8
        $region40: #{tpu_custom_call.1} parent=27 // pred_fallthru
          _
      $region28: #{tpu_custom_call.1} parent=5 // pred_fallthru
        _
      %p2515 = scmp.le.s32.totalorder 2, %s17
      // Predicated region
      $region41: #{tpu_custom_call.1} parent=5 // pred_check
        %p2516 = pneg %p2515
      $region42: #{tpu_custom_call.1} parent=5 // pred_check_branch
        %2518 = sbr.rel (%p2516) target = $region44
      $region43: #{tpu_custom_call.1} parent=5 // pred_region
        %s2519 = ssub.s32 %s17, 2
        // Predicated region
        $region45: #{tpu_custom_call.1} parent=43 // pred_check
          %p2520 = pneg %p112
        $region46: #{tpu_custom_call.1} parent=43 // pred_check_branch
          %2522 = sbr.rel (%p2520) target = $region48
        $region47: #{tpu_custom_call.1} parent=43 // pred_region
          %s2523 = sand.u32 %s97, 1
          %s2524 = scalar_lea.sflag [#allocation4], %s2523
          %s2525 = sand.u32 %s97, 1
          %s2526 = smul.addr %s2525, 128
          %s2527 = scalar_lea.vmem [#allocation7], %s2526
          %2528 = dma.done %s2524, 2048
        $region48: #{tpu_custom_call.1} parent=43 // pred_fallthru
          _
      $region44: #{tpu_custom_call.1} parent=5 // pred_fallthru
        _
    $region6: #{tpu_custom_call.1} parent=1 // loop_footer
      %s21 = sadd.s32 1, %s17
    $region7: #{tpu_custom_call.1} parent=1 // loop_footer_branch
      %16 = sbr.rel target = $region3
    $region8: #{tpu_custom_call.1} parent=1 // loop_exit
      _
    %2529 = vsyncpa [#allocation3], 1
    %s2530 = scalar_lea.sflag [#allocation3], 1
    %2531 = vsyncpa %s2530, 1
    %2532 = vsyncpa [#allocation6], 1
    %s2533 = scalar_lea.sflag [#allocation6], 1
    %2534 = vsyncpa %s2533, 1
    %2535 = vsyncpa [#allocation4], 1
    %s2536 = scalar_lea.sflag [#allocation4], 1
    %2537 = vsyncpa %s2536, 1

</llo_original>
